<compile_context>
chip_gen: v7x
topology: tpu7x:2x2x1
jax: 0.10.0
libtpu: 0.0.40
codegen_flags: <defaults>
</compile_context>

<pallas_src>
import jax
import jax.numpy as jnp
from jax import lax
from jax.experimental import pallas as pl
from jax.experimental.pallas import tpu as pltpu


# ----------------------------------------------------------------------------
# Kernel: one grid step = `row_block` rows; each row = 8 consecutive timesteps
# of one batch element flattened as (t_local, n, channel).  All conv stages,
# pool stages and residual adds stay on-chip; no HBM round-trips in between.
# ----------------------------------------------------------------------------
def _conv1d_encoder_kernel(x_ref, pos_ref, wb1_ref, wb2_ref, wb3_ref,
                           o1_ref, o2_ref, o3_ref):
    f32 = jnp.float32
    nh = o3_ref.shape[-1]                      # N * H (multiple of 128 here)

    def conv_stage(z, wb_ref):
        # wb_ref packs [W ; b]:  W is (K, Nout), bias is the last row.
        wb = wb_ref[...]
        w, b = wb[:-1, :], wb[-1:, :]
        return jnp.dot(z, w, preferred_element_type=f32) + b

    x = x_ref[...].astype(f32)                 # (R, 8*N*Cin)
    pos = pos_ref[...].astype(f32)             # (R, 8*N*H)

    # ---- conv path: one fused lane-dense matmul per stage -------------------
    y1 = conv_stage(x, wb1_ref)                # (R, 4*N*H)
    y2 = conv_stage(y1, wb2_ref)               # (R, 2*N*H)
    y3 = conv_stage(y2, wb3_ref)               # (R,   N*H)

    # ---- pos path: hierarchical averages of the 8 aligned time chunks -------
    c = [pos[:, k * nh:(k + 1) * nh] for k in range(8)]       # 8 x (R, N*H)
    s2 = [c[0] + c[1], c[2] + c[3], c[4] + c[5], c[6] + c[7]]
    s4 = [s2[0] + s2[1], s2[2] + s2[3]]
    s8 = s4[0] + s4[1]
    p1 = 0.5 * jnp.concatenate(s2, axis=1)     # (R, 4*N*H)
    p2 = 0.25 * jnp.concatenate(s4, axis=1)    # (R, 2*N*H)
    p3 = 0.125 * s8                            # (R,   N*H)

    # ---- residual adds + dense (multiple-of-128 lanes) stores ----------------
    o1_ref[...] = (y1 + p1).astype(o1_ref.dtype)
    o2_ref[...] = (y2 + p2).astype(o2_ref.dtype)
    o3_ref[...] = (y3 + p3).astype(o3_ref.dtype)


# ----------------------------------------------------------------------------
# Weight packing: PyTorch Conv1d (O, I, 2) weight -> block-structured matrix
# acting on an 8-timestep lane-dense row, bias appended as the last row.
# ----------------------------------------------------------------------------
def _stage_weight(w, b, n_nodes, n_pairs):
    """Returns [W_big ; b_big] with W_big: (2*n_pairs*n_nodes*I, n_pairs*n_nodes*O).

    W_big maps a row laid out as [t=0..2*n_pairs-1][n=0..n_nodes-1][c=0..I-1]
    to [j=0..n_pairs-1][n][o] with
        out[j, n, o] = sum_c w[o,c,0]*in[2j, n, c] + w[o,c,1]*in[2j+1, n, c] + b[o].
    Block-diagonal over n (nodes never mix) and over time pairs.
    """
    O, I, K = w.shape
    assert K == 2
    f32 = jnp.float32
    wp = jnp.transpose(w.astype(f32), (2, 1, 0))                 # (2, I, O)
    eye_n = jnp.eye(n_nodes, dtype=f32)
    pair = jnp.einsum('kio,nm->knimo', wp, eye_n)                # (2, n, I, n', O)
    pair = pair.reshape(2 * n_nodes * I, n_nodes * O)
    big = jnp.kron(jnp.eye(n_pairs, dtype=f32), pair)
    b_big = jnp.tile(b.astype(f32), n_pairs * n_nodes)
    return jnp.concatenate([big, b_big[None, :]], axis=0)        # (K+1, Nout)


# ----------------------------------------------------------------------------
# Wrapper
# ----------------------------------------------------------------------------
def conv1d_encoder_forward(x, pos, params, *, row_block_target=256):
    """x: (B, T, N, Cin), pos: (B, T, N, H).  Returns the three residual sums
    with shapes (B, T/2, N, H), (B, T/4, N, H), (B, T/8, N, H)."""
    B, T, N, Cin = x.shape
    H = pos.shape[-1]
    assert pos.shape == (B, T, N, H)
    assert T % 8 == 0, "T must be divisible by 8 (three stride-2 stages)"
    assert params["w1"].shape == (H, Cin, 2)
    T1, T2, T3 = T // 2, T // 4, T // 8
    NH = N * H

    # Packed, time-unrolled, node-block-diagonal weights (3 operands, not 9).
    wb1 = _stage_weight(params["w1"], params["b1"], N, 4)   # (8*N*Cin+1, 4*N*H)
    wb2 = _stage_weight(params["w2"], params["b2"], N, 2)   # (4*N*H +1, 2*N*H)
    wb3 = _stage_weight(params["w3"], params["b3"], N, 1)   # (2*N*H +1,   N*H)

    # Lane-dense row views (contiguous reshapes: free in HBM).
    rows = B * T3
    x_rows = x.reshape(rows, 8 * N * Cin)
    pos_rows = pos.reshape(rows, 8 * NH)

    # Row tiling: blocks of a multiple-of-8 rows (or the full extent), >=2 grid
    # steps when cheap so a v7x megacore can use both TensorCores, capped so the
    # double-buffered working set stays well under the 64 MiB (v7x) VMEM.
    if rows <= row_block_target:
        if rows >= 16 and rows % 16 == 0:
            row_block = rows // 2
        else:
            row_block = rows
    else:
        row_block = row_block_target            # multiple of 8; overhang is masked
    grid = (pl.cdiv(rows, row_block),)

    def row_spec(nlanes):
        return pl.BlockSpec((row_block, nlanes), lambda i: (i, 0))

    def w_spec(arr):
        return pl.BlockSpec(arr.shape, lambda i: (0, 0))

    o1_flat, o2_flat, o3_flat = pl.pallas_call(
        _conv1d_encoder_kernel,
        out_shape=(
            jax.ShapeDtypeStruct((rows, 4 * NH), x.dtype),
            jax.ShapeDtypeStruct((rows, 2 * NH), x.dtype),
            jax.ShapeDtypeStruct((rows, NH), x.dtype),
        ),
        grid=grid,
        in_specs=[
            row_spec(8 * N * Cin),
            row_spec(8 * NH),
            w_spec(wb1), w_spec(wb2), w_spec(wb3),
        ],
        out_specs=(
            row_spec(4 * NH),
            row_spec(2 * NH),
            row_spec(NH),
        ),
        compiler_params=pltpu.CompilerParams(
            dimension_semantics=("parallel",),
            vmem_limit_bytes=32 * 1024 * 1024,
        ),
    )(x_rows, pos_rows, wb1, wb2, wb3)

    out1 = o1_flat.reshape(B, T1, N, H)
    out2 = o2_flat.reshape(B, T2, N, H)
    out3 = o3_flat.reshape(B, T3, N, H)
    return out1, out2, out3


# ----------------------------------------------------------------------------
# Pure-JAX reference mirroring the PyTorch module exactly (for verification).
# ----------------------------------------------------------------------------
def conv1d_encoder_ref(x, pos, params):
    B, T, N, Cin = x.shape
    H = pos.shape[-1]

    xr = jnp.transpose(x, (0, 2, 3, 1)).reshape(B * N, Cin, T)     # (B*N, Cin, T)
    pr = jnp.transpose(pos, (0, 2, 3, 1)).reshape(B * N, H, T)     # (B*N, H,  T)

    def conv(z, w, b):
        y = lax.conv_general_dilated(z, w, (2,), "VALID",
                                     dimension_numbers=("NCH", "OIH", "NCH"))
        return y + b[None, :, None]

    x1 = conv(xr, params["w1"], params["b1"])
    x2 = conv(x1, params["w2"], params["b2"])
    x3 = conv(x2, params["w3"], params["b3"])

    def pool(z):
        return 0.5 * (z[:, :, 0::2] + z[:, :, 1::2])

    p1 = pool(pr)
    p2 = pool(p1)
    p3 = pool(p2)

    def back(z):
        L = z.shape[-1]
        return jnp.transpose(z.reshape(B, N, H, L), (0, 3, 1, 2))   # (B, L, N, H)

    return back(x1) + back(p1), back(x2) + back(p2), back(x3) + back(p3)


# ----------------------------------------------------------------------------
if __name__ == "__main__":
    def run_case(B, T, N, Cin, H, seed):
        key = jax.random.PRNGKey(seed)
        ks = jax.random.split(key, 8)
        x = jax.random.normal(ks[0], (B, T, N, Cin), jnp.float32)
        pos = jax.random.normal(ks[1], (B, T, N, H), jnp.float32)
        params = {
            "w1": 0.3 * jax.random.normal(ks[2], (H, Cin, 2), jnp.float32),
            "b1": 0.1 * jax.random.normal(ks[3], (H,), jnp.float32),
            "w2": 0.2 * jax.random.normal(ks[4], (H, H, 2), jnp.float32),
            "b2": 0.1 * jax.random.normal(ks[5], (H,), jnp.float32),
            "w3": 0.2 * jax.random.normal(ks[6], (H, H, 2), jnp.float32),
            "b3": 0.1 * jax.random.normal(ks[7], (H,), jnp.float32),
        }
        outs = conv1d_encoder_forward(x, pos, params)
        outs = jax.block_until_ready(outs)
        refs = conv1d_encoder_ref(x, pos, params)
        assert outs[0].shape == (B, T // 2, N, H)
        assert outs[1].shape == (B, T // 4, N, H)
        assert outs[2].shape == (B, T // 8, N, H)
        for o, r in zip(outs, refs):
            err = float(jnp.max(jnp.abs(o - r)))
            assert jnp.allclose(o, r, rtol=1e-4, atol=1e-4), err

    # Small shapes implied by the module (batch=2, seq=16, nodes=8, cin=4, hidden=32).
    run_case(B=2, T=16, N=8, Cin=4, H=32, seed=0)
    # Slightly larger case exercising the multi-step ("parallel") row grid.
    run_case(B=8, T=32, N=8, Cin=4, H=32, seed=1)

    print("KERNEL_OK")
</pallas_src>

<mosaic_0001>
module attributes {stable_mosaic.version = 11 : i64} {
  func.func @_conv1d_encoder_kernel(%arg0: i32, %arg1: memref<4x256xf32, #tpu.memory_space<vmem>>, %arg2: memref<4x2048xf32, #tpu.memory_space<vmem>>, %arg3: memref<257x1024xf32, #tpu.memory_space<vmem>>, %arg4: memref<1025x512xf32, #tpu.memory_space<vmem>>, %arg5: memref<513x256xf32, #tpu.memory_space<vmem>>, %arg6: memref<4x1024xf32, #tpu.memory_space<vmem>>, %arg7: memref<4x512xf32, #tpu.memory_space<vmem>>, %arg8: memref<4x256xf32, #tpu.memory_space<vmem>>) attributes {dimension_semantics = [#tpu.dimension_semantics<parallel>], iteration_bounds = array<i64: 1>, scalar_prefetch = 0 : i64, scratch_operands = 0 : i64, tpu.core_type = #tpu.core_type<tc>, window_params = [{transform_indices = @transform_0, window_bounds = array<i64: 4, 256>}, {transform_indices = @transform_1, window_bounds = array<i64: 4, 2048>}, {pipeline_mode = #tpu.pipeline_mode<synchronous>, transform_indices = @transform_2, window_bounds = array<i64: 257, 1024>}, {pipeline_mode = #tpu.pipeline_mode<synchronous>, transform_indices = @transform_3, window_bounds = array<i64: 1025, 512>}, {pipeline_mode = #tpu.pipeline_mode<synchronous>, transform_indices = @transform_4, window_bounds = array<i64: 513, 256>}, {transform_indices = @transform_5, window_bounds = array<i64: 4, 1024>}, {transform_indices = @transform_6, window_bounds = array<i64: 4, 512>}, {transform_indices = @transform_7, window_bounds = array<i64: 4, 256>}]} {
    %c0 = arith.constant 0 : index
    %c0_0 = arith.constant 0 : index
    %0 = vector.load %arg1[%c0, %c0_0] : memref<4x256xf32, #tpu.memory_space<vmem>>, vector<4x256xf32>
    %c0_1 = arith.constant 0 : index
    %c0_2 = arith.constant 0 : index
    %1 = vector.load %arg2[%c0_1, %c0_2] : memref<4x2048xf32, #tpu.memory_space<vmem>>, vector<4x2048xf32>
    %c0_3 = arith.constant 0 : index
    %c0_4 = arith.constant 0 : index
    %2 = vector.load %arg3[%c0_3, %c0_4] : memref<257x1024xf32, #tpu.memory_space<vmem>>, vector<257x1024xf32>
    %3 = vector.extract_strided_slice %2 {offsets = [0, 0], sizes = [256, 1024], strides = [1, 1]} : vector<257x1024xf32> to vector<256x1024xf32>
    %4 = vector.extract_strided_slice %2 {offsets = [256, 0], sizes = [1, 1024], strides = [1, 1]} : vector<257x1024xf32> to vector<1x1024xf32>
    %cst = arith.constant dense<0.000000e+00> : vector<4x1024xf32>
    %5 = tpu.matmul %0, %3, %cst {dimension_numbers = #tpu.dot_dimension_numbers<[1], [0], [0], [1], [0, 0, 1, 1], [], []>} : vector<4x256xf32>, vector<256x1024xf32>, vector<4x1024xf32> -> vector<4x1024xf32>
    %6 = vector.broadcast %4 : vector<1x1024xf32> to vector<4x1024xf32>
    %7 = arith.addf %5, %6 : vector<4x1024xf32>
    %c0_5 = arith.constant 0 : index
    %c0_6 = arith.constant 0 : index
    %8 = vector.load %arg4[%c0_5, %c0_6] : memref<1025x512xf32, #tpu.memory_space<vmem>>, vector<1025x512xf32>
    %9 = vector.extract_strided_slice %8 {offsets = [0, 0], sizes = [1024, 512], strides = [1, 1]} : vector<1025x512xf32> to vector<1024x512xf32>
    %10 = vector.extract_strided_slice %8 {offsets = [1024, 0], sizes = [1, 512], strides = [1, 1]} : vector<1025x512xf32> to vector<1x512xf32>
    %cst_7 = arith.constant dense<0.000000e+00> : vector<4x512xf32>
    %11 = tpu.matmul %7, %9, %cst_7 {dimension_numbers = #tpu.dot_dimension_numbers<[1], [0], [0], [1], [0, 0, 1, 1], [], []>} : vector<4x1024xf32>, vector<1024x512xf32>, vector<4x512xf32> -> vector<4x512xf32>
    %12 = vector.broadcast %10 : vector<1x512xf32> to vector<4x512xf32>
    %13 = arith.addf %11, %12 : vector<4x512xf32>
    %c0_8 = arith.constant 0 : index
    %c0_9 = arith.constant 0 : index
    %14 = vector.load %arg5[%c0_8, %c0_9] : memref<513x256xf32, #tpu.memory_space<vmem>>, vector<513x256xf32>
    %15 = vector.extract_strided_slice %14 {offsets = [0, 0], sizes = [512, 256], strides = [1, 1]} : vector<513x256xf32> to vector<512x256xf32>
    %16 = vector.extract_strided_slice %14 {offsets = [512, 0], sizes = [1, 256], strides = [1, 1]} : vector<513x256xf32> to vector<1x256xf32>
    %cst_10 = arith.constant dense<0.000000e+00> : vector<4x256xf32>
    %17 = tpu.matmul %13, %15, %cst_10 {dimension_numbers = #tpu.dot_dimension_numbers<[1], [0], [0], [1], [0, 0, 1, 1], [], []>} : vector<4x512xf32>, vector<512x256xf32>, vector<4x256xf32> -> vector<4x256xf32>
    %18 = vector.broadcast %16 : vector<1x256xf32> to vector<4x256xf32>
    %19 = arith.addf %17, %18 : vector<4x256xf32>
    %20 = vector.extract_strided_slice %1 {offsets = [0, 0], sizes = [4, 256], strides = [1, 1]} : vector<4x2048xf32> to vector<4x256xf32>
    %21 = vector.extract_strided_slice %1 {offsets = [0, 256], sizes = [4, 256], strides = [1, 1]} : vector<4x2048xf32> to vector<4x256xf32>
    %22 = vector.extract_strided_slice %1 {offsets = [0, 512], sizes = [4, 256], strides = [1, 1]} : vector<4x2048xf32> to vector<4x256xf32>
    %23 = vector.extract_strided_slice %1 {offsets = [0, 768], sizes = [4, 256], strides = [1, 1]} : vector<4x2048xf32> to vector<4x256xf32>
    %24 = vector.extract_strided_slice %1 {offsets = [0, 1024], sizes = [4, 256], strides = [1, 1]} : vector<4x2048xf32> to vector<4x256xf32>
    %25 = vector.extract_strided_slice %1 {offsets = [0, 1280], sizes = [4, 256], strides = [1, 1]} : vector<4x2048xf32> to vector<4x256xf32>
    %26 = vector.extract_strided_slice %1 {offsets = [0, 1536], sizes = [4, 256], strides = [1, 1]} : vector<4x2048xf32> to vector<4x256xf32>
    %27 = vector.extract_strided_slice %1 {offsets = [0, 1792], sizes = [4, 256], strides = [1, 1]} : vector<4x2048xf32> to vector<4x256xf32>
    %28 = arith.addf %20, %21 : vector<4x256xf32>
    %29 = arith.addf %22, %23 : vector<4x256xf32>
    %30 = arith.addf %24, %25 : vector<4x256xf32>
    %31 = arith.addf %26, %27 : vector<4x256xf32>
    %32 = arith.addf %28, %29 : vector<4x256xf32>
    %33 = arith.addf %30, %31 : vector<4x256xf32>
    %34 = arith.addf %32, %33 : vector<4x256xf32>
    %35 = tpu.concatenate %28, %29, %30, %31 in 1 : vector<4x256xf32>, vector<4x256xf32>, vector<4x256xf32>, vector<4x256xf32> -> vector<4x1024xf32>
    %cst_11 = arith.constant 5.000000e-01 : f32
    %36 = vector.broadcast %cst_11 : f32 to vector<4x1024xf32>
    %37 = arith.mulf %36, %35 : vector<4x1024xf32>
    %38 = tpu.concatenate %32, %33 in 1 : vector<4x256xf32>, vector<4x256xf32> -> vector<4x512xf32>
    %cst_12 = arith.constant 2.500000e-01 : f32
    %39 = vector.broadcast %cst_12 : f32 to vector<4x512xf32>
    %40 = arith.mulf %39, %38 : vector<4x512xf32>
    %cst_13 = arith.constant 1.250000e-01 : f32
    %41 = vector.broadcast %cst_13 : f32 to vector<4x256xf32>
    %42 = arith.mulf %41, %34 : vector<4x256xf32>
    %43 = arith.addf %7, %37 : vector<4x1024xf32>
    %c0_14 = arith.constant 0 : index
    %c0_15 = arith.constant 0 : index
    %44 = vector.load %arg6[%c0_14, %c0_15] : memref<4x1024xf32, #tpu.memory_space<vmem>>, vector<4x1024xf32>
    tpu.vector_store %arg6[%c0_14, %c0_15], %43 {strides = array<i32>} : memref<4x1024xf32, #tpu.memory_space<vmem>>, vector<4x1024xf32>,
    %45 = arith.addf %13, %40 : vector<4x512xf32>
    %c0_16 = arith.constant 0 : index
    %c0_17 = arith.constant 0 : index
    %46 = vector.load %arg7[%c0_16, %c0_17] : memref<4x512xf32, #tpu.memory_space<vmem>>, vector<4x512xf32>
    tpu.vector_store %arg7[%c0_16, %c0_17], %45 {strides = array<i32>} : memref<4x512xf32, #tpu.memory_space<vmem>>, vector<4x512xf32>,
    %47 = arith.addf %19, %42 : vector<4x256xf32>
    %c0_18 = arith.constant 0 : index
    %c0_19 = arith.constant 0 : index
    %48 = vector.load %arg8[%c0_18, %c0_19] : memref<4x256xf32, #tpu.memory_space<vmem>>, vector<4x256xf32>
    tpu.vector_store %arg8[%c0_18, %c0_19], %47 {strides = array<i32>} : memref<4x256xf32, #tpu.memory_space<vmem>>, vector<4x256xf32>,
    return
  }
  func.func @transform_0(%arg0: i32) -> (i32, i32) {
    %c0_i32 = arith.constant 0 : i32
    %c0_i32_0 = arith.constant 0 : i32
    return %arg0, %c0_i32 : i32, i32
  }
  func.func @transform_1(%arg0: i32) -> (i32, i32) {
    %c0_i32 = arith.constant 0 : i32
    %c0_i32_0 = arith.constant 0 : i32
    return %arg0, %c0_i32 : i32, i32
  }
  func.func @transform_2(%arg0: i32) -> (i32, i32) {
    %c0_i32 = arith.constant 0 : i32
    %c0_i32_0 = arith.constant 0 : i32
    %c0_i32_1 = arith.constant 0 : i32
    return %c0_i32, %c0_i32_0 : i32, i32
  }
  func.func @transform_3(%arg0: i32) -> (i32, i32) {
    %c0_i32 = arith.constant 0 : i32
    %c0_i32_0 = arith.constant 0 : i32
    %c0_i32_1 = arith.constant 0 : i32
    return %c0_i32, %c0_i32_0 : i32, i32
  }
  func.func @transform_4(%arg0: i32) -> (i32, i32) {
    %c0_i32 = arith.constant 0 : i32
    %c0_i32_0 = arith.constant 0 : i32
    %c0_i32_1 = arith.constant 0 : i32
    return %c0_i32, %c0_i32_0 : i32, i32
  }
  func.func @transform_5(%arg0: i32) -> (i32, i32) {
    %c0_i32 = arith.constant 0 : i32
    %c0_i32_0 = arith.constant 0 : i32
    return %arg0, %c0_i32 : i32, i32
  }
  func.func @transform_6(%arg0: i32) -> (i32, i32) {
    %c0_i32 = arith.constant 0 : i32
    %c0_i32_0 = arith.constant 0 : i32
    return %arg0, %c0_i32 : i32, i32
  }
  func.func @transform_7(%arg0: i32) -> (i32, i32) {
    %c0_i32 = arith.constant 0 : i32
    %c0_i32_0 = arith.constant 0 : i32
    return %arg0, %c0_i32 : i32, i32
  }
}

</mosaic_0001>

<llo_original>
// kernel: tpu_custom_call.1
$region0: #{tpu_custom_call.1}
  #allocation0 [shape = 'u32[]', space=smem, size = 0x4, offset = 0x4, fixed_abs, tag = 'smem constant byte address 0x4 - core index']
  #allocation1 [shape = 'u32[144,128]{1,0:T(1,128)}', space=vmem, size = 0x12000, scoped, tag = 'internal scratch']
  %s0 = inlined_call_operand.hbm [shape: f32[4,256], index: 0, kind: input, shape index: {}]
  %s1 = inlined_call_operand.hbm [shape: f32[4,2048], index: 1, kind: input, shape index: {}]
  %s2 = inlined_call_operand.hbm [shape: f32[257,1024], index: 2, kind: input, shape index: {}]
  %s3 = inlined_call_operand.hbm [shape: f32[1025,512], index: 3, kind: input, shape index: {}]
  %s4 = inlined_call_operand.hbm [shape: f32[513,256], index: 4, kind: input, shape index: {}]
  %s5 = inlined_call_operand.hbm [shape: f32[4,1024], index: 5, kind: output, shape index: {0}]
  %s6 = inlined_call_operand.hbm [shape: f32[4,512], index: 6, kind: output, shape index: {1}]
  %s7 = inlined_call_operand.hbm [shape: f32[4,256], index: 7, kind: output, shape index: {2}]
  %8 = xla_tuple %s5, %s6, %s7
  %s9 = sld [smem:[#allocation0]]
  $region66: #{tpu_custom_call.1} parent=0
    _
  %s11 = ssub.s32 1, %s9
  %s12 = scalar_select 0, %s11, %s9
  $region1: #{tpu_custom_call.1} parent=0
    #allocation2 [shape = 'u8[4096]{0}', space=vmem, size = 0x1000, scoped, tag = 'input window, operand 0, single buffered']
    #allocation3 [shape = 's32[1]{0}', space=sflag, size = 0x4, scoped, tag = 'scoped memory for tpu_custom_call.1']
    #allocation4 [shape = 's32[1]{0}', space=sflag, size = 0x4, scoped, tag = 'scoped memory for tpu_custom_call.1']
    #allocation5 [shape = 'u8[32768]{0}', space=vmem, size = 0x8000, scoped, tag = 'input window, operand 1, single buffered']
    #allocation6 [shape = 's32[1]{0}', space=sflag, size = 0x4, scoped, tag = 'scoped memory for tpu_custom_call.1']
    #allocation7 [shape = 'u8[1081344]{0}', space=vmem, size = 0x108000, scoped, tag = 'input window, operand 2, single buffered']
    #allocation8 [shape = 'u8[2113536]{0}', space=vmem, size = 0x204000, scoped, tag = 'input window, operand 3, single buffered']
    #allocation9 [shape = 's32[1]{0}', space=sflag, size = 0x4, scoped, tag = 'scoped memory for tpu_custom_call.1']
    #allocation10 [shape = 'u8[532480]{0}', space=vmem, size = 0x82000, scoped, tag = 'input window, operand 4, single buffered']
    #allocation11 [shape = 'u8[16384]{0}', space=vmem, size = 0x4000, scoped, tag = 'output window, operand 0, single buffered']
    #allocation12 [shape = 'u8[8192]{0}', space=vmem, size = 0x2000, scoped, tag = 'output window, operand 1, single buffered']
    #allocation13 [shape = 's32[1]{0}', space=sflag, size = 0x4, scoped, tag = 'scoped memory for tpu_custom_call.1']
    #allocation14 [shape = 'u8[4096]{0}', space=vmem, size = 0x1000, scoped, tag = 'output window, operand 2, single buffered']
    %13 = vsyncpa [#allocation3], 0
    %14 = vsyncpa [#allocation6], 0
    %15 = vsyncpa [#allocation9], 0
    %16 = vsyncpa [#allocation4], 0
    %17 = vsyncpa [#allocation13], 0
    // Predicated region
    $region2: #{tpu_custom_call.1} parent=1 // pred_check
      _
    $region3: #{tpu_custom_call.1} parent=1 // pred_check_branch
      %19 = sbr.rel (0) target = $region5
    $region4: #{tpu_custom_call.1} parent=1 // pred_region
      %s21 = ssub.s32 128, 128
      %22 = vsyncadd [#allocation3], %s21
      %s24 = sshll.u32 [#allocation2], 4
      %s25 = int_to_ptr.vmem [resolvable:$true] %s24
      %27 = dma.hbm_to_vmem [thread:$0]  %s0, 128, %s25, [#allocation3]
    $region5: #{tpu_custom_call.1} parent=1 // pred_fallthru
      _
    // Predicated region
    $region6: #{tpu_custom_call.1} parent=1 // pred_check
      _
    $region7: #{tpu_custom_call.1} parent=1 // pred_check_branch
      %29 = sbr.rel (0) target = $region9
    $region8: #{tpu_custom_call.1} parent=1 // pred_region
      %s31 = ssub.s32 1024, 1024
      %32 = vsyncadd [#allocation6], %s31
      %s34 = sshll.u32 [#allocation5], 4
      %s35 = int_to_ptr.vmem [resolvable:$true] %s34
      %37 = dma.hbm_to_vmem [thread:$0]  %s1, 1024, %s35, [#allocation6]
    $region9: #{tpu_custom_call.1} parent=1 // pred_fallthru
      _
    // Predicated region
    $region10: #{tpu_custom_call.1} parent=1 // pred_check
      _
    $region11: #{tpu_custom_call.1} parent=1 // pred_check_branch
      %39 = sbr.rel (0) target = $region13
    $region12: #{tpu_custom_call.1} parent=1 // pred_region
      %s41 = ssub.s32 33792, 33792
      %42 = vsyncadd [#allocation6], %s41
      %s43 = sshll.u32 [#allocation7], 4
      %s44 = int_to_ptr.vmem [resolvable:$true] %s43
      %49 = dma.hbm_to_vmem [thread:$0]  %s2, 33792, %s44, [#allocation6], 1024, 1024, 64
    $region13: #{tpu_custom_call.1} parent=1 // pred_fallthru
      _
    // Predicated region
    $region14: #{tpu_custom_call.1} parent=1 // pred_check
      _
    $region15: #{tpu_custom_call.1} parent=1 // pred_check_branch
      %51 = sbr.rel (0) target = $region17
    $region16: #{tpu_custom_call.1} parent=1 // pred_region
      %s53 = ssub.s32 66048, 66048
      %54 = vsyncadd [#allocation9], %s53
      %s55 = sshll.u32 [#allocation8], 4
      %s56 = int_to_ptr.vmem [resolvable:$true] %s55
      %61 = dma.hbm_to_vmem [thread:$0]  %s3, 66048, %s56, [#allocation9], 512, 512, 32
    $region17: #{tpu_custom_call.1} parent=1 // pred_fallthru
      _
    // Predicated region
    $region18: #{tpu_custom_call.1} parent=1 // pred_check
      _
    $region19: #{tpu_custom_call.1} parent=1 // pred_check_branch
      %63 = sbr.rel (0) target = $region21
    $region20: #{tpu_custom_call.1} parent=1 // pred_region
      %s65 = ssub.s32 16640, 16640
      %66 = vsyncadd [#allocation9], %s65
      %s67 = sshll.u32 [#allocation10], 4
      %s68 = int_to_ptr.vmem [resolvable:$true] %s67
      %73 = dma.hbm_to_vmem [thread:$0]  %s4, 16640, %s68, [#allocation9], 256, 256, 16
    $region21: #{tpu_custom_call.1} parent=1 // pred_fallthru
      _
    // Predicated region
    $region22: #{tpu_custom_call.1} parent=1 // pred_check
      _
    $region23: #{tpu_custom_call.1} parent=1 // pred_check_branch
      %75 = sbr.rel (0) target = $region25
    $region24: #{tpu_custom_call.1} parent=1 // pred_region
      %76 = dma.done [#allocation3], 128
    $region25: #{tpu_custom_call.1} parent=1 // pred_fallthru
      _
    // Predicated region
    $region26: #{tpu_custom_call.1} parent=1 // pred_check
      _
    $region27: #{tpu_custom_call.1} parent=1 // pred_check_branch
      %78 = sbr.rel (0) target = $region29
    $region28: #{tpu_custom_call.1} parent=1 // pred_region
      %79 = dma.done [#allocation6], 1024
    $region29: #{tpu_custom_call.1} parent=1 // pred_fallthru
      _
    // Predicated region
    $region30: #{tpu_custom_call.1} parent=1 // pred_check
      _
    $region31: #{tpu_custom_call.1} parent=1 // pred_check_branch
      %81 = sbr.rel (0) target = $region33
    $region32: #{tpu_custom_call.1} parent=1 // pred_region
      %82 = dma.done [#allocation6], 33792
    $region33: #{tpu_custom_call.1} parent=1 // pred_fallthru
      _
    // Predicated region
    $region34: #{tpu_custom_call.1} parent=1 // pred_check
      _
    $region35: #{tpu_custom_call.1} parent=1 // pred_check_branch
      %84 = sbr.rel (0) target = $region37
    $region36: #{tpu_custom_call.1} parent=1 // pred_region
      %85 = dma.done [#allocation9], 66048
    $region37: #{tpu_custom_call.1} parent=1 // pred_fallthru
      _
    // Predicated region
    $region38: #{tpu_custom_call.1} parent=1 // pred_check
      _
    $region39: #{tpu_custom_call.1} parent=1 // pred_check_branch
      %87 = sbr.rel (0) target = $region41
    $region40: #{tpu_custom_call.1} parent=1 // pred_region
      %88 = dma.done [#allocation9], 16640
    $region41: #{tpu_custom_call.1} parent=1 // pred_fallthru
      _
    %v89 = vld [vmem:[#allocation2] sm:$0xff]
    %v90 = vld [vmem:[#allocation5] sm:$0xff]
    %v91 = vld [vmem:[#allocation5 + $0x8] sm:$0xff]
    %v92 = vld [vmem:[#allocation5 + $0x10] sm:$0xff]
    %v93 = vld [vmem:[#allocation5 + $0x18] sm:$0xff]
    %v94 = vld [vmem:[#allocation5 + $0x20] sm:$0xff]
    %v95 = vld [vmem:[#allocation5 + $0x28] sm:$0xff]
    %v96 = vld [vmem:[#allocation5 + $0x30] sm:$0xff]
    %v97 = vld [vmem:[#allocation5 + $0x38] sm:$0xff]
    %v98 = vld [vmem:[#allocation7] sm:$0xff]
    %v99 = vld [vmem:[#allocation7 + $0x8] sm:$0xff]
    %v100 = vld [vmem:[#allocation7 + $0x10] sm:$0xff]
    %v101 = vld [vmem:[#allocation7 + $0x18] sm:$0xff]
    %v102 = vld [vmem:[#allocation7 + $0x20] sm:$0xff]
    %v103 = vld [vmem:[#allocation7 + $0x28] sm:$0xff]
    %v104 = vld [vmem:[#allocation7 + $0x30] sm:$0xff]
    %v105 = vld [vmem:[#allocation7 + $0x38] sm:$0xff]
    %v106 = vld [vmem:[#allocation7 + $0x40] sm:$0xff]
    %v107 = vld [vmem:[#allocation7 + $0x48] sm:$0xff]
    %v108 = vld [vmem:[#allocation7 + $0x50] sm:$0xff]
    %v109 = vld [vmem:[#allocation7 + $0x58] sm:$0xff]
    %v110 = vld [vmem:[#allocation7 + $0x60] sm:$0xff]
    %v111 = vld [vmem:[#allocation7 + $0x68] sm:$0xff]
    %v112 = vld [vmem:[#allocation7 + $0x70] sm:$0xff]
    %v113 = vld [vmem:[#allocation7 + $0x78] sm:$0xff]
    %v114 = vld [vmem:[#allocation7 + $0x80] sm:$0xff]
    %v115 = vld [vmem:[#allocation7 + $0x88] sm:$0xff]
    %v116 = vld [vmem:[#allocation7 + $0x90] sm:$0xff]
    %v117 = vld [vmem:[#allocation7 + $0x98] sm:$0xff]
    %v118 = vld [vmem:[#allocation7 + $0xa0] sm:$0xff]
    %v119 = vld [vmem:[#allocation7 + $0xa8] sm:$0xff]
    %v120 = vld [vmem:[#allocation7 + $0xb0] sm:$0xff]
    %v121 = vld [vmem:[#allocation7 + $0xb8] sm:$0xff]
    %v122 = vld [vmem:[#allocation7 + $0xc0] sm:$0xff]
    %v123 = vld [vmem:[#allocation7 + $0xc8] sm:$0xff]
    %v124 = vld [vmem:[#allocation7 + $0xd0] sm:$0xff]
    %v125 = vld [vmem:[#allocation7 + $0xd8] sm:$0xff]
    %v126 = vld [vmem:[#allocation7 + $0xe0] sm:$0xff]
    %v127 = vld [vmem:[#allocation7 + $0xe8] sm:$0xff]
    %v128 = vld [vmem:[#allocation7 + $0xf0] sm:$0xff]
    %v129 = vld [vmem:[#allocation7 + $0xf8] sm:$0xff]
    %v130 = vld [vmem:[#allocation7 + $0x100] sm:$0xff]
    %v131 = vld [vmem:[#allocation7 + $0x108] sm:$0xff]
    %v132 = vld [vmem:[#allocation7 + $0x110] sm:$0xff]
    %v133 = vld [vmem:[#allocation7 + $0x118] sm:$0xff]
    %v134 = vld [vmem:[#allocation7 + $0x120] sm:$0xff]
    %v135 = vld [vmem:[#allocation7 + $0x128] sm:$0xff]
    %v136 = vld [vmem:[#allocation7 + $0x130] sm:$0xff]
    %v137 = vld [vmem:[#allocation7 + $0x138] sm:$0xff]
    %v138 = vld [vmem:[#allocation7 + $0x140] sm:$0xff]
    %v139 = vld [vmem:[#allocation7 + $0x148] sm:$0xff]
    %v140 = vld [vmem:[#allocation7 + $0x150] sm:$0xff]
    %v141 = vld [vmem:[#allocation7 + $0x158] sm:$0xff]
    %v142 = vld [vmem:[#allocation7 + $0x160] sm:$0xff]
    %v143 = vld [vmem:[#allocation7 + $0x168] sm:$0xff]
    %v144 = vld [vmem:[#allocation7 + $0x170] sm:$0xff]
    %v145 = vld [vmem:[#allocation7 + $0x178] sm:$0xff]
    %v146 = vld [vmem:[#allocation7 + $0x180] sm:$0xff]
    %v147 = vld [vmem:[#allocation7 + $0x188] sm:$0xff]
    %v148 = vld [vmem:[#allocation7 + $0x190] sm:$0xff]
    %v149 = vld [vmem:[#allocation7 + $0x198] sm:$0xff]
    %v150 = vld [vmem:[#allocation7 + $0x1a0] sm:$0xff]
    %v151 = vld [vmem:[#allocation7 + $0x1a8] sm:$0xff]
    %v152 = vld [vmem:[#allocation7 + $0x1b0] sm:$0xff]
    %v153 = vld [vmem:[#allocation7 + $0x1b8] sm:$0xff]
    %v154 = vld [vmem:[#allocation7 + $0x1c0] sm:$0xff]
    %v155 = vld [vmem:[#allocation7 + $0x1c8] sm:$0xff]
    %v156 = vld [vmem:[#allocation7 + $0x1d0] sm:$0xff]
    %v157 = vld [vmem:[#allocation7 + $0x1d8] sm:$0xff]
    %v158 = vld [vmem:[#allocation7 + $0x1e0] sm:$0xff]
    %v159 = vld [vmem:[#allocation7 + $0x1e8] sm:$0xff]
    %v160 = vld [vmem:[#allocation7 + $0x1f0] sm:$0xff]
    %v161 = vld [vmem:[#allocation7 + $0x1f8] sm:$0xff]
    %v162 = vld [vmem:[#allocation7 + $0x200] sm:$0xff]
    %v163 = vld [vmem:[#allocation7 + $0x208] sm:$0xff]
    %v164 = vld [vmem:[#allocation7 + $0x210] sm:$0xff]
    %v165 = vld [vmem:[#allocation7 + $0x218] sm:$0xff]
    %v166 = vld [vmem:[#allocation7 + $0x220] sm:$0xff]
    %v167 = vld [vmem:[#allocation7 + $0x228] sm:$0xff]
    %v168 = vld [vmem:[#allocation7 + $0x230] sm:$0xff]
    %v169 = vld [vmem:[#allocation7 + $0x238] sm:$0xff]
    %v170 = vld [vmem:[#allocation7 + $0x240] sm:$0xff]
    %v171 = vld [vmem:[#allocation7 + $0x248] sm:$0xff]
    %v172 = vld [vmem:[#allocation7 + $0x250] sm:$0xff]
    %v173 = vld [vmem:[#allocation7 + $0x258] sm:$0xff]
    %v174 = vld [vmem:[#allocation7 + $0x260] sm:$0xff]
    %v175 = vld [vmem:[#allocation7 + $0x268] sm:$0xff]
    %v176 = vld [vmem:[#allocation7 + $0x270] sm:$0xff]
    %v177 = vld [vmem:[#allocation7 + $0x278] sm:$0xff]
    %v178 = vld [vmem:[#allocation7 + $0x280] sm:$0xff]
    %v179 = vld [vmem:[#allocation7 + $0x288] sm:$0xff]
    %v180 = vld [vmem:[#allocation7 + $0x290] sm:$0xff]
    %v181 = vld [vmem:[#allocation7 + $0x298] sm:$0xff]
    %v182 = vld [vmem:[#allocation7 + $0x2a0] sm:$0xff]
    %v183 = vld [vmem:[#allocation7 + $0x2a8] sm:$0xff]
    %v184 = vld [vmem:[#allocation7 + $0x2b0] sm:$0xff]
    %v185 = vld [vmem:[#allocation7 + $0x2b8] sm:$0xff]
    %v186 = vld [vmem:[#allocation7 + $0x2c0] sm:$0xff]
    %v187 = vld [vmem:[#allocation7 + $0x2c8] sm:$0xff]
    %v188 = vld [vmem:[#allocation7 + $0x2d0] sm:$0xff]
    %v189 = vld [vmem:[#allocation7 + $0x2d8] sm:$0xff]
    %v190 = vld [vmem:[#allocation7 + $0x2e0] sm:$0xff]
    %v191 = vld [vmem:[#allocation7 + $0x2e8] sm:$0xff]
    %v192 = vld [vmem:[#allocation7 + $0x2f0] sm:$0xff]
    %v193 = vld [vmem:[#allocation7 + $0x2f8] sm:$0xff]
    %v194 = vld [vmem:[#allocation7 + $0x300] sm:$0xff]
    %v195 = vld [vmem:[#allocation7 + $0x308] sm:$0xff]
    %v196 = vld [vmem:[#allocation7 + $0x310] sm:$0xff]
    %v197 = vld [vmem:[#allocation7 + $0x318] sm:$0xff]
    %v198 = vld [vmem:[#allocation7 + $0x320] sm:$0xff]
    %v199 = vld [vmem:[#allocation7 + $0x328] sm:$0xff]
    %v200 = vld [vmem:[#allocation7 + $0x330] sm:$0xff]
    %v201 = vld [vmem:[#allocation7 + $0x338] sm:$0xff]
    %v202 = vld [vmem:[#allocation7 + $0x340] sm:$0xff]
    %v203 = vld [vmem:[#allocation7 + $0x348] sm:$0xff]
    %v204 = vld [vmem:[#allocation7 + $0x350] sm:$0xff]
    %v205 = vld [vmem:[#allocation7 + $0x358] sm:$0xff]
    %v206 = vld [vmem:[#allocation7 + $0x360] sm:$0xff]
    %v207 = vld [vmem:[#allocation7 + $0x368] sm:$0xff]
    %v208 = vld [vmem:[#allocation7 + $0x370] sm:$0xff]
    %v209 = vld [vmem:[#allocation7 + $0x378] sm:$0xff]
    %v210 = vld [vmem:[#allocation7 + $0x380] sm:$0xff]
    %v211 = vld [vmem:[#allocation7 + $0x388] sm:$0xff]
    %v212 = vld [vmem:[#allocation7 + $0x390] sm:$0xff]
    %v213 = vld [vmem:[#allocation7 + $0x398] sm:$0xff]
    %v214 = vld [vmem:[#allocation7 + $0x3a0] sm:$0xff]
    %v215 = vld [vmem:[#allocation7 + $0x3a8] sm:$0xff]
    %v216 = vld [vmem:[#allocation7 + $0x3b0] sm:$0xff]
    %v217 = vld [vmem:[#allocation7 + $0x3b8] sm:$0xff]
    %v218 = vld [vmem:[#allocation7 + $0x3c0] sm:$0xff]
    %v219 = vld [vmem:[#allocation7 + $0x3c8] sm:$0xff]
    %v220 = vld [vmem:[#allocation7 + $0x3d0] sm:$0xff]
    %v221 = vld [vmem:[#allocation7 + $0x3d8] sm:$0xff]
    %v222 = vld [vmem:[#allocation7 + $0x3e0] sm:$0xff]
    %v223 = vld [vmem:[#allocation7 + $0x3e8] sm:$0xff]
    %v224 = vld [vmem:[#allocation7 + $0x3f0] sm:$0xff]
    %v225 = vld [vmem:[#allocation7 + $0x3f8] sm:$0xff]
    %v226 = vld [vmem:[#allocation7 + $0x400] sm:$0xff]
    %v227 = vld [vmem:[#allocation7 + $0x408] sm:$0xff]
    %v228 = vld [vmem:[#allocation7 + $0x410] sm:$0xff]
    %v229 = vld [vmem:[#allocation7 + $0x418] sm:$0xff]
    %v230 = vld [vmem:[#allocation7 + $0x420] sm:$0xff]
    %v231 = vld [vmem:[#allocation7 + $0x428] sm:$0xff]
    %v232 = vld [vmem:[#allocation7 + $0x430] sm:$0xff]
    %v233 = vld [vmem:[#allocation7 + $0x438] sm:$0xff]
    %v234 = vld [vmem:[#allocation7 + $0x440] sm:$0xff]
    %v235 = vld [vmem:[#allocation7 + $0x448] sm:$0xff]
    %v236 = vld [vmem:[#allocation7 + $0x450] sm:$0xff]
    %v237 = vld [vmem:[#allocation7 + $0x458] sm:$0xff]
    %v238 = vld [vmem:[#allocation7 + $0x460] sm:$0xff]
    %v239 = vld [vmem:[#allocation7 + $0x468] sm:$0xff]
    %v240 = vld [vmem:[#allocation7 + $0x470] sm:$0xff]
    %v241 = vld [vmem:[#allocation7 + $0x478] sm:$0xff]
    %v242 = vld [vmem:[#allocation7 + $0x480] sm:$0xff]
    %v243 = vld [vmem:[#allocation7 + $0x488] sm:$0xff]
    %v244 = vld [vmem:[#allocation7 + $0x490] sm:$0xff]
    %v245 = vld [vmem:[#allocation7 + $0x498] sm:$0xff]
    %v246 = vld [vmem:[#allocation7 + $0x4a0] sm:$0xff]
    %v247 = vld [vmem:[#allocation7 + $0x4a8] sm:$0xff]
    %v248 = vld [vmem:[#allocation7 + $0x4b0] sm:$0xff]
    %v249 = vld [vmem:[#allocation7 + $0x4b8] sm:$0xff]
    %v250 = vld [vmem:[#allocation7 + $0x4c0] sm:$0xff]
    %v251 = vld [vmem:[#allocation7 + $0x4c8] sm:$0xff]
    %v252 = vld [vmem:[#allocation7 + $0x4d0] sm:$0xff]
    %v253 = vld [vmem:[#allocation7 + $0x4d8] sm:$0xff]
    %v254 = vld [vmem:[#allocation7 + $0x4e0] sm:$0xff]
    %v255 = vld [vmem:[#allocation7 + $0x4e8] sm:$0xff]
    %v256 = vld [vmem:[#allocation7 + $0x4f0] sm:$0xff]
    %v257 = vld [vmem:[#allocation7 + $0x4f8] sm:$0xff]
    %v258 = vld [vmem:[#allocation7 + $0x500] sm:$0xff]
    %v259 = vld [vmem:[#allocation7 + $0x508] sm:$0xff]
    %v260 = vld [vmem:[#allocation7 + $0x510] sm:$0xff]
    %v261 = vld [vmem:[#allocation7 + $0x518] sm:$0xff]
    %v262 = vld [vmem:[#allocation7 + $0x520] sm:$0xff]
    %v263 = vld [vmem:[#allocation7 + $0x528] sm:$0xff]
    %v264 = vld [vmem:[#allocation7 + $0x530] sm:$0xff]
    %v265 = vld [vmem:[#allocation7 + $0x538] sm:$0xff]
    %v266 = vld [vmem:[#allocation7 + $0x540] sm:$0xff]
    %v267 = vld [vmem:[#allocation7 + $0x548] sm:$0xff]
    %v268 = vld [vmem:[#allocation7 + $0x550] sm:$0xff]
    %v269 = vld [vmem:[#allocation7 + $0x558] sm:$0xff]
    %v270 = vld [vmem:[#allocation7 + $0x560] sm:$0xff]
    %v271 = vld [vmem:[#allocation7 + $0x568] sm:$0xff]
    %v272 = vld [vmem:[#allocation7 + $0x570] sm:$0xff]
    %v273 = vld [vmem:[#allocation7 + $0x578] sm:$0xff]
    %v274 = vld [vmem:[#allocation7 + $0x580] sm:$0xff]
    %v275 = vld [vmem:[#allocation7 + $0x588] sm:$0xff]
    %v276 = vld [vmem:[#allocation7 + $0x590] sm:$0xff]
    %v277 = vld [vmem:[#allocation7 + $0x598] sm:$0xff]
    %v278 = vld [vmem:[#allocation7 + $0x5a0] sm:$0xff]
    %v279 = vld [vmem:[#allocation7 + $0x5a8] sm:$0xff]
    %v280 = vld [vmem:[#allocation7 + $0x5b0] sm:$0xff]
    %v281 = vld [vmem:[#allocation7 + $0x5b8] sm:$0xff]
    %v282 = vld [vmem:[#allocation7 + $0x5c0] sm:$0xff]
    %v283 = vld [vmem:[#allocation7 + $0x5c8] sm:$0xff]
    %v284 = vld [vmem:[#allocation7 + $0x5d0] sm:$0xff]
    %v285 = vld [vmem:[#allocation7 + $0x5d8] sm:$0xff]
    %v286 = vld [vmem:[#allocation7 + $0x5e0] sm:$0xff]
    %v287 = vld [vmem:[#allocation7 + $0x5e8] sm:$0xff]
    %v288 = vld [vmem:[#allocation7 + $0x5f0] sm:$0xff]
    %v289 = vld [vmem:[#allocation7 + $0x5f8] sm:$0xff]
    %v290 = vld [vmem:[#allocation7 + $0x600] sm:$0xff]
    %v291 = vld [vmem:[#allocation7 + $0x608] sm:$0xff]
    %v292 = vld [vmem:[#allocation7 + $0x610] sm:$0xff]
    %v293 = vld [vmem:[#allocation7 + $0x618] sm:$0xff]
    %v294 = vld [vmem:[#allocation7 + $0x620] sm:$0xff]
    %v295 = vld [vmem:[#allocation7 + $0x628] sm:$0xff]
    %v296 = vld [vmem:[#allocation7 + $0x630] sm:$0xff]
    %v297 = vld [vmem:[#allocation7 + $0x638] sm:$0xff]
    %v298 = vld [vmem:[#allocation7 + $0x640] sm:$0xff]
    %v299 = vld [vmem:[#allocation7 + $0x648] sm:$0xff]
    %v300 = vld [vmem:[#allocation7 + $0x650] sm:$0xff]
    %v301 = vld [vmem:[#allocation7 + $0x658] sm:$0xff]
    %v302 = vld [vmem:[#allocation7 + $0x660] sm:$0xff]
    %v303 = vld [vmem:[#allocation7 + $0x668] sm:$0xff]
    %v304 = vld [vmem:[#allocation7 + $0x670] sm:$0xff]
    %v305 = vld [vmem:[#allocation7 + $0x678] sm:$0xff]
    %v306 = vld [vmem:[#allocation7 + $0x680] sm:$0xff]
    %v307 = vld [vmem:[#allocation7 + $0x688] sm:$0xff]
    %v308 = vld [vmem:[#allocation7 + $0x690] sm:$0xff]
    %v309 = vld [vmem:[#allocation7 + $0x698] sm:$0xff]
    %v310 = vld [vmem:[#allocation7 + $0x6a0] sm:$0xff]
    %v311 = vld [vmem:[#allocation7 + $0x6a8] sm:$0xff]
    %v312 = vld [vmem:[#allocation7 + $0x6b0] sm:$0xff]
    %v313 = vld [vmem:[#allocation7 + $0x6b8] sm:$0xff]
    %v314 = vld [vmem:[#allocation7 + $0x6c0] sm:$0xff]
    %v315 = vld [vmem:[#allocation7 + $0x6c8] sm:$0xff]
    %v316 = vld [vmem:[#allocation7 + $0x6d0] sm:$0xff]
    %v317 = vld [vmem:[#allocation7 + $0x6d8] sm:$0xff]
    %v318 = vld [vmem:[#allocation7 + $0x6e0] sm:$0xff]
    %v319 = vld [vmem:[#allocation7 + $0x6e8] sm:$0xff]
    %v320 = vld [vmem:[#allocation7 + $0x6f0] sm:$0xff]
    %v321 = vld [vmem:[#allocation7 + $0x6f8] sm:$0xff]
    %v322 = vld [vmem:[#allocation7 + $0x700] sm:$0xff]
    %v323 = vld [vmem:[#allocation7 + $0x708] sm:$0xff]
    %v324 = vld [vmem:[#allocation7 + $0x710] sm:$0xff]
    %v325 = vld [vmem:[#allocation7 + $0x718] sm:$0xff]
    %v326 = vld [vmem:[#allocation7 + $0x720] sm:$0xff]
    %v327 = vld [vmem:[#allocation7 + $0x728] sm:$0xff]
    %v328 = vld [vmem:[#allocation7 + $0x730] sm:$0xff]
    %v329 = vld [vmem:[#allocation7 + $0x738] sm:$0xff]
    %v330 = vld [vmem:[#allocation7 + $0x740] sm:$0xff]
    %v331 = vld [vmem:[#allocation7 + $0x748] sm:$0xff]
    %v332 = vld [vmem:[#allocation7 + $0x750] sm:$0xff]
    %v333 = vld [vmem:[#allocation7 + $0x758] sm:$0xff]
    %v334 = vld [vmem:[#allocation7 + $0x760] sm:$0xff]
    %v335 = vld [vmem:[#allocation7 + $0x768] sm:$0xff]
    %v336 = vld [vmem:[#allocation7 + $0x770] sm:$0xff]
    %v337 = vld [vmem:[#allocation7 + $0x778] sm:$0xff]
    %v338 = vld [vmem:[#allocation7 + $0x780] sm:$0xff]
    %v339 = vld [vmem:[#allocation7 + $0x788] sm:$0xff]
    %v340 = vld [vmem:[#allocation7 + $0x790] sm:$0xff]
    %v341 = vld [vmem:[#allocation7 + $0x798] sm:$0xff]
    %v342 = vld [vmem:[#allocation7 + $0x7a0] sm:$0xff]
    %v343 = vld [vmem:[#allocation7 + $0x7a8] sm:$0xff]
    %v344 = vld [vmem:[#allocation7 + $0x7b0] sm:$0xff]
    %v345 = vld [vmem:[#allocation7 + $0x7b8] sm:$0xff]
    %v346 = vld [vmem:[#allocation7 + $0x7c0] sm:$0xff]
    %v347 = vld [vmem:[#allocation7 + $0x7c8] sm:$0xff]
    %v348 = vld [vmem:[#allocation7 + $0x7d0] sm:$0xff]
    %v349 = vld [vmem:[#allocation7 + $0x7d8] sm:$0xff]
    %v350 = vld [vmem:[#allocation7 + $0x7e0] sm:$0xff]
    %v351 = vld [vmem:[#allocation7 + $0x7e8] sm:$0xff]
    %v352 = vld [vmem:[#allocation7 + $0x7f0] sm:$0xff]
    %v353 = vld [vmem:[#allocation7 + $0x7f8] sm:$0xff]
    %v354 = vld [vmem:[#allocation7 + $0x800] sm:$0x1]
    %v355 = vld [vmem:[#allocation7 + $0x808] sm:$0x1]
    %v356 = vld [vmem:[#allocation7 + $0x810] sm:$0x1]
    %v357 = vld [vmem:[#allocation7 + $0x818] sm:$0x1]
    %v358 = vld [vmem:[#allocation7 + $0x820] sm:$0x1]
    %v359 = vld [vmem:[#allocation7 + $0x828] sm:$0x1]
    %v360 = vld [vmem:[#allocation7 + $0x830] sm:$0x1]
    %v361 = vld [vmem:[#allocation7 + $0x838] sm:$0x1]
    %v362 = vlaneseq
    %v363 = vshrl.u32 %v362, 7
    %v364 = vsub.s32 0, %v363
    %v365 = vrot.slane %v354, %v364
    %v366 = vlaneseq
    %v367 = vshrl.u32 %v366, 7
    %v368 = vsub.s32 0, %v367
    %v369 = vrot.slane %v355, %v368
    %v370 = vlaneseq
    %v371 = vshrl.u32 %v370, 7
    %v372 = vsub.s32 0, %v371
    %v373 = vrot.slane %v356, %v372
    %v374 = vlaneseq
    %v375 = vshrl.u32 %v374, 7
    %v376 = vsub.s32 0, %v375
    %v377 = vrot.slane %v357, %v376
    %v378 = vlaneseq
    %v379 = vshrl.u32 %v378, 7
    %v380 = vsub.s32 0, %v379
    %v381 = vrot.slane %v358, %v380
    %v382 = vlaneseq
    %v383 = vshrl.u32 %v382, 7
    %v384 = vsub.s32 0, %v383
    %v385 = vrot.slane %v359, %v384
    %v386 = vlaneseq
    %v387 = vshrl.u32 %v386, 7
    %v388 = vsub.s32 0, %v387
    %v389 = vrot.slane %v360, %v388
    %v390 = vlaneseq
    %v391 = vshrl.u32 %v390, 7
    %v392 = vsub.s32 0, %v391
    %v393 = vrot.slane %v361, %v392
    %v395 = vcombine.high %v89, %v89
    %397 = vmatprep.subr.mxu0 %v99
    %398 = vmatpush1.msra.mxu0 %v98
    %399 = vmatprep.subr.mxu0 %v107
    %400 = vmatpush1.msra.mxu0 %v106
    %401 = vmatprep.subr.mxu0 %v115
    %402 = vmatpush1.msra.mxu0 %v114
    %403 = vmatprep.subr.mxu0 %v123
    %404 = vmatpush1.msra.mxu0 %v122
    %405 = vmatprep.subr.mxu0 %v131
    %406 = vmatpush1.msra.mxu0 %v130
    %407 = vmatprep.subr.mxu0 %v139
    %408 = vmatpush1.msra.mxu0 %v138
    %409 = vmatprep.subr.mxu0 %v147
    %410 = vmatpush1.msra.mxu0 %v146
    %411 = vmatprep.subr.mxu0 %v155
    %412 = vmatpush1.msra.mxu0 %v154
    %413 = vmatprep.subr.mxu0 %v163
    %414 = vmatpush1.msra.mxu0 %v162
    %415 = vmatprep.subr.mxu0 %v171
    %416 = vmatpush1.msra.mxu0 %v170
    %417 = vmatprep.subr.mxu0 %v179
    %418 = vmatpush1.msra.mxu0 %v178
    %419 = vmatprep.subr.mxu0 %v187
    %420 = vmatpush1.msra.mxu0 %v186
    %421 = vmatprep.subr.mxu0 %v195
    %422 = vmatpush1.msra.mxu0 %v194
    %423 = vmatprep.subr.mxu0 %v203
    %424 = vmatpush1.msra.mxu0 %v202
    %425 = vmatprep.subr.mxu0 %v211
    %426 = vmatpush1.msra.mxu0 %v210
    %427 = vmatprep.subr.mxu0 %v219
    %428 = vmatpush1.msra.mxu0 %v218
    %429 = vmatprep.subr.mxu0 %v227
    %430 = vmatpush1.msra.mxu0 %v226
    %431 = vmatprep.subr.mxu0 %v235
    %432 = vmatpush1.msra.mxu0 %v234
    %433 = vmatprep.subr.mxu0 %v243
    %434 = vmatpush1.msra.mxu0 %v242
    %435 = vmatprep.subr.mxu0 %v251
    %436 = vmatpush1.msra.mxu0 %v250
    %437 = vmatprep.subr.mxu0 %v259
    %438 = vmatpush1.msra.mxu0 %v258
    %439 = vmatprep.subr.mxu0 %v267
    %440 = vmatpush1.msra.mxu0 %v266
    %441 = vmatprep.subr.mxu0 %v275
    %442 = vmatpush1.msra.mxu0 %v274
    %443 = vmatprep.subr.mxu0 %v283
    %444 = vmatpush1.msra.mxu0 %v282
    %445 = vmatprep.subr.mxu0 %v291
    %446 = vmatpush1.msra.mxu0 %v290
    %447 = vmatprep.subr.mxu0 %v299
    %448 = vmatpush1.msra.mxu0 %v298
    %449 = vmatprep.subr.mxu0 %v307
    %450 = vmatpush1.msra.mxu0 %v306
    %451 = vmatprep.subr.mxu0 %v315
    %452 = vmatpush1.msra.mxu0 %v314
    %453 = vmatprep.subr.mxu0 %v323
    %454 = vmatpush1.msra.mxu0 %v322
    %455 = vmatprep.subr.mxu0 %v331
    %456 = vmatpush1.msra.mxu0 %v330
    %457 = vmatprep.subr.mxu0 %v339
    %458 = vmatpush1.msra.mxu0 %v338
    %459 = vmatprep.subr.mxu0 %v347
    %460 = vmatpush1.msra.mxu0 %v346
    %461 = vmatprep.mubr.f32.mxu0 %v395
    %462 = vmatmul.mubr.f32.gmra.mrb[0].mxu0 %v89
    %v463 = vpop.f32.mrb[0].mxu0
    %v464 = vadd.f32 %v365, %v463
    %v465 = vpop.f32.mrb[0].mxu0
    %v466 = vadd.f32 %v369, %v465
    %467 = vdwg.mxu0
    %468 = vmatprep.subr.mxu0 %v101
    %469 = vmatpush1.msra.mxu0 %v100
    %470 = vmatprep.subr.mxu0 %v109
    %471 = vmatpush1.msra.mxu0 %v108
    %472 = vmatprep.subr.mxu0 %v117
    %473 = vmatpush1.msra.mxu0 %v116
    %474 = vmatprep.subr.mxu0 %v125
    %475 = vmatpush1.msra.mxu0 %v124
    %476 = vmatprep.subr.mxu0 %v133
    %477 = vmatpush1.msra.mxu0 %v132
    %478 = vmatprep.subr.mxu0 %v141
    %479 = vmatpush1.msra.mxu0 %v140
    %480 = vmatprep.subr.mxu0 %v149
    %481 = vmatpush1.msra.mxu0 %v148
    %482 = vmatprep.subr.mxu0 %v157
    %483 = vmatpush1.msra.mxu0 %v156
    %484 = vmatprep.subr.mxu0 %v165
    %485 = vmatpush1.msra.mxu0 %v164
    %486 = vmatprep.subr.mxu0 %v173
    %487 = vmatpush1.msra.mxu0 %v172
    %488 = vmatprep.subr.mxu0 %v181
    %489 = vmatpush1.msra.mxu0 %v180
    %490 = vmatprep.subr.mxu0 %v189
    %491 = vmatpush1.msra.mxu0 %v188
    %492 = vmatprep.subr.mxu0 %v197
    %493 = vmatpush1.msra.mxu0 %v196
    %494 = vmatprep.subr.mxu0 %v205
    %495 = vmatpush1.msra.mxu0 %v204
    %496 = vmatprep.subr.mxu0 %v213
    %497 = vmatpush1.msra.mxu0 %v212
    %498 = vmatprep.subr.mxu0 %v221
    %499 = vmatpush1.msra.mxu0 %v220
    %500 = vmatprep.subr.mxu0 %v229
    %501 = vmatpush1.msra.mxu0 %v228
    %502 = vmatprep.subr.mxu0 %v237
    %503 = vmatpush1.msra.mxu0 %v236
    %504 = vmatprep.subr.mxu0 %v245
    %505 = vmatpush1.msra.mxu0 %v244
    %506 = vmatprep.subr.mxu0 %v253
    %507 = vmatpush1.msra.mxu0 %v252
    %508 = vmatprep.subr.mxu0 %v261
    %509 = vmatpush1.msra.mxu0 %v260
    %510 = vmatprep.subr.mxu0 %v269
    %511 = vmatpush1.msra.mxu0 %v268
    %512 = vmatprep.subr.mxu0 %v277
    %513 = vmatpush1.msra.mxu0 %v276
    %514 = vmatprep.subr.mxu0 %v285
    %515 = vmatpush1.msra.mxu0 %v284
    %516 = vmatprep.subr.mxu0 %v293
    %517 = vmatpush1.msra.mxu0 %v292
    %518 = vmatprep.subr.mxu0 %v301
    %519 = vmatpush1.msra.mxu0 %v300
    %520 = vmatprep.subr.mxu0 %v309
    %521 = vmatpush1.msra.mxu0 %v308
    %522 = vmatprep.subr.mxu0 %v317
    %523 = vmatpush1.msra.mxu0 %v316
    %524 = vmatprep.subr.mxu0 %v325
    %525 = vmatpush1.msra.mxu0 %v324
    %526 = vmatprep.subr.mxu0 %v333
    %527 = vmatpush1.msra.mxu0 %v332
    %528 = vmatprep.subr.mxu0 %v341
    %529 = vmatpush1.msra.mxu0 %v340
    %530 = vmatprep.subr.mxu0 %v349
    %531 = vmatpush1.msra.mxu0 %v348
    %532 = vmatprep.mubr.f32.mxu0 %v395
    %533 = vmatmul.mubr.f32.gmra.mrb[0].mxu0 %v89
    %v534 = vpop.f32.mrb[0].mxu0
    %v535 = vadd.f32 %v373, %v534
    %v536 = vpop.f32.mrb[0].mxu0
    %v537 = vadd.f32 %v377, %v536
    %538 = vdwg.mxu0
    %539 = vmatprep.subr.mxu0 %v103
    %540 = vmatpush1.msra.mxu0 %v102
    %541 = vmatprep.subr.mxu0 %v111
    %542 = vmatpush1.msra.mxu0 %v110
    %543 = vmatprep.subr.mxu0 %v119
    %544 = vmatpush1.msra.mxu0 %v118
    %545 = vmatprep.subr.mxu0 %v127
    %546 = vmatpush1.msra.mxu0 %v126
    %547 = vmatprep.subr.mxu0 %v135
    %548 = vmatpush1.msra.mxu0 %v134
    %549 = vmatprep.subr.mxu0 %v143
    %550 = vmatpush1.msra.mxu0 %v142
    %551 = vmatprep.subr.mxu0 %v151
    %552 = vmatpush1.msra.mxu0 %v150
    %553 = vmatprep.subr.mxu0 %v159
    %554 = vmatpush1.msra.mxu0 %v158
    %555 = vmatprep.subr.mxu0 %v167
    %556 = vmatpush1.msra.mxu0 %v166
    %557 = vmatprep.subr.mxu0 %v175
    %558 = vmatpush1.msra.mxu0 %v174
    %559 = vmatprep.subr.mxu0 %v183
    %560 = vmatpush1.msra.mxu0 %v182
    %561 = vmatprep.subr.mxu0 %v191
    %562 = vmatpush1.msra.mxu0 %v190
    %563 = vmatprep.subr.mxu0 %v199
    %564 = vmatpush1.msra.mxu0 %v198
    %565 = vmatprep.subr.mxu0 %v207
    %566 = vmatpush1.msra.mxu0 %v206
    %567 = vmatprep.subr.mxu0 %v215
    %568 = vmatpush1.msra.mxu0 %v214
    %569 = vmatprep.subr.mxu0 %v223
    %570 = vmatpush1.msra.mxu0 %v222
    %571 = vmatprep.subr.mxu0 %v231
    %572 = vmatpush1.msra.mxu0 %v230
    %573 = vmatprep.subr.mxu0 %v239
    %574 = vmatpush1.msra.mxu0 %v238
    %575 = vmatprep.subr.mxu0 %v247
    %576 = vmatpush1.msra.mxu0 %v246
    %577 = vmatprep.subr.mxu0 %v255
    %578 = vmatpush1.msra.mxu0 %v254
    %579 = vmatprep.subr.mxu0 %v263
    %580 = vmatpush1.msra.mxu0 %v262
    %581 = vmatprep.subr.mxu0 %v271
    %582 = vmatpush1.msra.mxu0 %v270
    %583 = vmatprep.subr.mxu0 %v279
    %584 = vmatpush1.msra.mxu0 %v278
    %585 = vmatprep.subr.mxu0 %v287
    %586 = vmatpush1.msra.mxu0 %v286
    %587 = vmatprep.subr.mxu0 %v295
    %588 = vmatpush1.msra.mxu0 %v294
    %589 = vmatprep.subr.mxu0 %v303
    %590 = vmatpush1.msra.mxu0 %v302
    %591 = vmatprep.subr.mxu0 %v311
    %592 = vmatpush1.msra.mxu0 %v310
    %593 = vmatprep.subr.mxu0 %v319
    %594 = vmatpush1.msra.mxu0 %v318
    %595 = vmatprep.subr.mxu0 %v327
    %596 = vmatpush1.msra.mxu0 %v326
    %597 = vmatprep.subr.mxu0 %v335
    %598 = vmatpush1.msra.mxu0 %v334
    %599 = vmatprep.subr.mxu0 %v343
    %600 = vmatpush1.msra.mxu0 %v342
    %601 = vmatprep.subr.mxu0 %v351
    %602 = vmatpush1.msra.mxu0 %v350
    %603 = vmatprep.mubr.f32.mxu0 %v395
    %604 = vmatmul.mubr.f32.gmra.mrb[0].mxu0 %v89
    %v605 = vpop.f32.mrb[0].mxu0
    %v606 = vadd.f32 %v381, %v605
    %v607 = vpop.f32.mrb[0].mxu0
    %v608 = vadd.f32 %v385, %v607
    %609 = vdwg.mxu0
    %610 = vmatprep.subr.mxu0 %v105
    %611 = vmatpush1.msra.mxu0 %v104
    %612 = vmatprep.subr.mxu0 %v113
    %613 = vmatpush1.msra.mxu0 %v112
    %614 = vmatprep.subr.mxu0 %v121
    %615 = vmatpush1.msra.mxu0 %v120
    %616 = vmatprep.subr.mxu0 %v129
    %617 = vmatpush1.msra.mxu0 %v128
    %618 = vmatprep.subr.mxu0 %v137
    %619 = vmatpush1.msra.mxu0 %v136
    %620 = vmatprep.subr.mxu0 %v145
    %621 = vmatpush1.msra.mxu0 %v144
    %622 = vmatprep.subr.mxu0 %v153
    %623 = vmatpush1.msra.mxu0 %v152
    %624 = vmatprep.subr.mxu0 %v161
    %625 = vmatpush1.msra.mxu0 %v160
    %626 = vmatprep.subr.mxu0 %v169
    %627 = vmatpush1.msra.mxu0 %v168
    %628 = vmatprep.subr.mxu0 %v177
    %629 = vmatpush1.msra.mxu0 %v176
    %630 = vmatprep.subr.mxu0 %v185
    %631 = vmatpush1.msra.mxu0 %v184
    %632 = vmatprep.subr.mxu0 %v193
    %633 = vmatpush1.msra.mxu0 %v192
    %634 = vmatprep.subr.mxu0 %v201
    %635 = vmatpush1.msra.mxu0 %v200
    %636 = vmatprep.subr.mxu0 %v209
    %637 = vmatpush1.msra.mxu0 %v208
    %638 = vmatprep.subr.mxu0 %v217
    %639 = vmatpush1.msra.mxu0 %v216
    %640 = vmatprep.subr.mxu0 %v225
    %641 = vmatpush1.msra.mxu0 %v224
    %642 = vmatprep.subr.mxu0 %v233
    %643 = vmatpush1.msra.mxu0 %v232
    %644 = vmatprep.subr.mxu0 %v241
    %645 = vmatpush1.msra.mxu0 %v240
    %646 = vmatprep.subr.mxu0 %v249
    %647 = vmatpush1.msra.mxu0 %v248
    %648 = vmatprep.subr.mxu0 %v257
    %649 = vmatpush1.msra.mxu0 %v256
    %650 = vmatprep.subr.mxu0 %v265
    %651 = vmatpush1.msra.mxu0 %v264
    %652 = vmatprep.subr.mxu0 %v273
    %653 = vmatpush1.msra.mxu0 %v272
    %654 = vmatprep.subr.mxu0 %v281
    %655 = vmatpush1.msra.mxu0 %v280
    %656 = vmatprep.subr.mxu0 %v289
    %657 = vmatpush1.msra.mxu0 %v288
    %658 = vmatprep.subr.mxu0 %v297
    %659 = vmatpush1.msra.mxu0 %v296
    %660 = vmatprep.subr.mxu0 %v305
    %661 = vmatpush1.msra.mxu0 %v304
    %662 = vmatprep.subr.mxu0 %v313
    %663 = vmatpush1.msra.mxu0 %v312
    %664 = vmatprep.subr.mxu0 %v321
    %665 = vmatpush1.msra.mxu0 %v320
    %666 = vmatprep.subr.mxu0 %v329
    %667 = vmatpush1.msra.mxu0 %v328
    %668 = vmatprep.subr.mxu0 %v337
    %669 = vmatpush1.msra.mxu0 %v336
    %670 = vmatprep.subr.mxu0 %v345
    %671 = vmatpush1.msra.mxu0 %v344
    %672 = vmatprep.subr.mxu0 %v353
    %673 = vmatpush1.msra.mxu0 %v352
    %674 = vmatprep.mubr.f32.mxu0 %v395
    %675 = vmatmul.mubr.f32.gmra.mrb[0].mxu0 %v89
    %v676 = vpop.f32.mrb[0].mxu0
    %v677 = vadd.f32 %v389, %v676
    %v678 = vpop.f32.mrb[0].mxu0
    %v679 = vadd.f32 %v393, %v678
    %680 = vdwg.mxu0
    %v681 = vld [vmem:[#allocation8] sm:$0xff]
    %v682 = vld [vmem:[#allocation8 + $0x8] sm:$0xff]
    %v683 = vld [vmem:[#allocation8 + $0x10] sm:$0xff]
    %v684 = vld [vmem:[#allocation8 + $0x18] sm:$0xff]
    %v685 = vld [vmem:[#allocation8 + $0x20] sm:$0xff]
    %v686 = vld [vmem:[#allocation8 + $0x28] sm:$0xff]
    %v687 = vld [vmem:[#allocation8 + $0x30] sm:$0xff]
    %v688 = vld [vmem:[#allocation8 + $0x38] sm:$0xff]
    %v689 = vld [vmem:[#allocation8 + $0x40] sm:$0xff]
    %v690 = vld [vmem:[#allocation8 + $0x48] sm:$0xff]
    %v691 = vld [vmem:[#allocation8 + $0x50] sm:$0xff]
    %v692 = vld [vmem:[#allocation8 + $0x58] sm:$0xff]
    %v693 = vld [vmem:[#allocation8 + $0x60] sm:$0xff]
    %v694 = vld [vmem:[#allocation8 + $0x68] sm:$0xff]
    %v695 = vld [vmem:[#allocation8 + $0x70] sm:$0xff]
    %v696 = vld [vmem:[#allocation8 + $0x78] sm:$0xff]
    %v697 = vld [vmem:[#allocation8 + $0x80] sm:$0xff]
    %v698 = vld [vmem:[#allocation8 + $0x88] sm:$0xff]
    %v699 = vld [vmem:[#allocation8 + $0x90] sm:$0xff]
    %v700 = vld [vmem:[#allocation8 + $0x98] sm:$0xff]
    %v701 = vld [vmem:[#allocation8 + $0xa0] sm:$0xff]
    %v702 = vld [vmem:[#allocation8 + $0xa8] sm:$0xff]
    %v703 = vld [vmem:[#allocation8 + $0xb0] sm:$0xff]
    %v704 = vld [vmem:[#allocation8 + $0xb8] sm:$0xff]
    %v705 = vld [vmem:[#allocation8 + $0xc0] sm:$0xff]
    %v706 = vld [vmem:[#allocation8 + $0xc8] sm:$0xff]
    %v707 = vld [vmem:[#allocation8 + $0xd0] sm:$0xff]
    %v708 = vld [vmem:[#allocation8 + $0xd8] sm:$0xff]
    %v709 = vld [vmem:[#allocation8 + $0xe0] sm:$0xff]
    %v710 = vld [vmem:[#allocation8 + $0xe8] sm:$0xff]
    %v711 = vld [vmem:[#allocation8 + $0xf0] sm:$0xff]
    %v712 = vld [vmem:[#allocation8 + $0xf8] sm:$0xff]
    %v713 = vld [vmem:[#allocation8 + $0x100] sm:$0xff]
    %v714 = vld [vmem:[#allocation8 + $0x108] sm:$0xff]
    %v715 = vld [vmem:[#allocation8 + $0x110] sm:$0xff]
    %v716 = vld [vmem:[#allocation8 + $0x118] sm:$0xff]
    %v717 = vld [vmem:[#allocation8 + $0x120] sm:$0xff]
    %v718 = vld [vmem:[#allocation8 + $0x128] sm:$0xff]
    %v719 = vld [vmem:[#allocation8 + $0x130] sm:$0xff]
    %v720 = vld [vmem:[#allocation8 + $0x138] sm:$0xff]
    %v721 = vld [vmem:[#allocation8 + $0x140] sm:$0xff]
    %v722 = vld [vmem:[#allocation8 + $0x148] sm:$0xff]
    %v723 = vld [vmem:[#allocation8 + $0x150] sm:$0xff]
    %v724 = vld [vmem:[#allocation8 + $0x158] sm:$0xff]
    %v725 = vld [vmem:[#allocation8 + $0x160] sm:$0xff]
    %v726 = vld [vmem:[#allocation8 + $0x168] sm:$0xff]
    %v727 = vld [vmem:[#allocation8 + $0x170] sm:$0xff]
    %v728 = vld [vmem:[#allocation8 + $0x178] sm:$0xff]
    %v729 = vld [vmem:[#allocation8 + $0x180] sm:$0xff]
    %v730 = vld [vmem:[#allocation8 + $0x188] sm:$0xff]
    %v731 = vld [vmem:[#allocation8 + $0x190] sm:$0xff]
    %v732 = vld [vmem:[#allocation8 + $0x198] sm:$0xff]
    %v733 = vld [vmem:[#allocation8 + $0x1a0] sm:$0xff]
    %v734 = vld [vmem:[#allocation8 + $0x1a8] sm:$0xff]
    %v735 = vld [vmem:[#allocation8 + $0x1b0] sm:$0xff]
    %v736 = vld [vmem:[#allocation8 + $0x1b8] sm:$0xff]
    %v737 = vld [vmem:[#allocation8 + $0x1c0] sm:$0xff]
    %v738 = vld [vmem:[#allocation8 + $0x1c8] sm:$0xff]
    %v739 = vld [vmem:[#allocation8 + $0x1d0] sm:$0xff]
    %v740 = vld [vmem:[#allocation8 + $0x1d8] sm:$0xff]
    %v741 = vld [vmem:[#allocation8 + $0x1e0] sm:$0xff]
    %v742 = vld [vmem:[#allocation8 + $0x1e8] sm:$0xff]
    %v743 = vld [vmem:[#allocation8 + $0x1f0] sm:$0xff]
    %v744 = vld [vmem:[#allocation8 + $0x1f8] sm:$0xff]
    %v745 = vld [vmem:[#allocation8 + $0x200] sm:$0xff]
    %v746 = vld [vmem:[#allocation8 + $0x208] sm:$0xff]
    %v747 = vld [vmem:[#allocation8 + $0x210] sm:$0xff]
    %v748 = vld [vmem:[#allocation8 + $0x218] sm:$0xff]
    %v749 = vld [vmem:[#allocation8 + $0x220] sm:$0xff]
    %v750 = vld [vmem:[#allocation8 + $0x228] sm:$0xff]
    %v751 = vld [vmem:[#allocation8 + $0x230] sm:$0xff]
    %v752 = vld [vmem:[#allocation8 + $0x238] sm:$0xff]
    %v753 = vld [vmem:[#allocation8 + $0x240] sm:$0xff]
    %v754 = vld [vmem:[#allocation8 + $0x248] sm:$0xff]
    %v755 = vld [vmem:[#allocation8 + $0x250] sm:$0xff]
    %v756 = vld [vmem:[#allocation8 + $0x258] sm:$0xff]
    %v757 = vld [vmem:[#allocation8 + $0x260] sm:$0xff]
    %v758 = vld [vmem:[#allocation8 + $0x268] sm:$0xff]
    %v759 = vld [vmem:[#allocation8 + $0x270] sm:$0xff]
    %v760 = vld [vmem:[#allocation8 + $0x278] sm:$0xff]
    %v761 = vld [vmem:[#allocation8 + $0x280] sm:$0xff]
    %v762 = vld [vmem:[#allocation8 + $0x288] sm:$0xff]
    %v763 = vld [vmem:[#allocation8 + $0x290] sm:$0xff]
    %v764 = vld [vmem:[#allocation8 + $0x298] sm:$0xff]
    %v765 = vld [vmem:[#allocation8 + $0x2a0] sm:$0xff]
    %v766 = vld [vmem:[#allocation8 + $0x2a8] sm:$0xff]
    %v767 = vld [vmem:[#allocation8 + $0x2b0] sm:$0xff]
    %v768 = vld [vmem:[#allocation8 + $0x2b8] sm:$0xff]
    %v769 = vld [vmem:[#allocation8 + $0x2c0] sm:$0xff]
    %v770 = vld [vmem:[#allocation8 + $0x2c8] sm:$0xff]
    %v771 = vld [vmem:[#allocation8 + $0x2d0] sm:$0xff]
    %v772 = vld [vmem:[#allocation8 + $0x2d8] sm:$0xff]
    %v773 = vld [vmem:[#allocation8 + $0x2e0] sm:$0xff]
    %v774 = vld [vmem:[#allocation8 + $0x2e8] sm:$0xff]
    %v775 = vld [vmem:[#allocation8 + $0x2f0] sm:$0xff]
    %v776 = vld [vmem:[#allocation8 + $0x2f8] sm:$0xff]
    %v777 = vld [vmem:[#allocation8 + $0x300] sm:$0xff]
    %v778 = vld [vmem:[#allocation8 + $0x308] sm:$0xff]
    %v779 = vld [vmem:[#allocation8 + $0x310] sm:$0xff]
    %v780 = vld [vmem:[#allocation8 + $0x318] sm:$0xff]
    %v781 = vld [vmem:[#allocation8 + $0x320] sm:$0xff]
    %v782 = vld [vmem:[#allocation8 + $0x328] sm:$0xff]
    %v783 = vld [vmem:[#allocation8 + $0x330] sm:$0xff]
    %v784 = vld [vmem:[#allocation8 + $0x338] sm:$0xff]
    %v785 = vld [vmem:[#allocation8 + $0x340] sm:$0xff]
    %v786 = vld [vmem:[#allocation8 + $0x348] sm:$0xff]
    %v787 = vld [vmem:[#allocation8 + $0x350] sm:$0xff]
    %v788 = vld [vmem:[#allocation8 + $0x358] sm:$0xff]
    %v789 = vld [vmem:[#allocation8 + $0x360] sm:$0xff]
    %v790 = vld [vmem:[#allocation8 + $0x368] sm:$0xff]
    %v791 = vld [vmem:[#allocation8 + $0x370] sm:$0xff]
    %v792 = vld [vmem:[#allocation8 + $0x378] sm:$0xff]
    %v793 = vld [vmem:[#allocation8 + $0x380] sm:$0xff]
    %v794 = vld [vmem:[#allocation8 + $0x388] sm:$0xff]
    %v795 = vld [vmem:[#allocation8 + $0x390] sm:$0xff]
    %v796 = vld [vmem:[#allocation8 + $0x398] sm:$0xff]
    %v797 = vld [vmem:[#allocation8 + $0x3a0] sm:$0xff]
    %v798 = vld [vmem:[#allocation8 + $0x3a8] sm:$0xff]
    %v799 = vld [vmem:[#allocation8 + $0x3b0] sm:$0xff]
    %v800 = vld [vmem:[#allocation8 + $0x3b8] sm:$0xff]
    %v801 = vld [vmem:[#allocation8 + $0x3c0] sm:$0xff]
    %v802 = vld [vmem:[#allocation8 + $0x3c8] sm:$0xff]
    %v803 = vld [vmem:[#allocation8 + $0x3d0] sm:$0xff]
    %v804 = vld [vmem:[#allocation8 + $0x3d8] sm:$0xff]
    %v805 = vld [vmem:[#allocation8 + $0x3e0] sm:$0xff]
    %v806 = vld [vmem:[#allocation8 + $0x3e8] sm:$0xff]
    %v807 = vld [vmem:[#allocation8 + $0x3f0] sm:$0xff]
    %v808 = vld [vmem:[#allocation8 + $0x3f8] sm:$0xff]
    %v809 = vld [vmem:[#allocation8 + $0x400] sm:$0xff]
    %v810 = vld [vmem:[#allocation8 + $0x408] sm:$0xff]
    %v811 = vld [vmem:[#allocation8 + $0x410] sm:$0xff]
    %v812 = vld [vmem:[#allocation8 + $0x418] sm:$0xff]
    %v813 = vld [vmem:[#allocation8 + $0x420] sm:$0xff]
    %v814 = vld [vmem:[#allocation8 + $0x428] sm:$0xff]
    %v815 = vld [vmem:[#allocation8 + $0x430] sm:$0xff]
    %v816 = vld [vmem:[#allocation8 + $0x438] sm:$0xff]
    %v817 = vld [vmem:[#allocation8 + $0x440] sm:$0xff]
    %v818 = vld [vmem:[#allocation8 + $0x448] sm:$0xff]
    %v819 = vld [vmem:[#allocation8 + $0x450] sm:$0xff]
    %v820 = vld [vmem:[#allocation8 + $0x458] sm:$0xff]
    %v821 = vld [vmem:[#allocation8 + $0x460] sm:$0xff]
    %v822 = vld [vmem:[#allocation8 + $0x468] sm:$0xff]
    %v823 = vld [vmem:[#allocation8 + $0x470] sm:$0xff]
    %v824 = vld [vmem:[#allocation8 + $0x478] sm:$0xff]
    %v825 = vld [vmem:[#allocation8 + $0x480] sm:$0xff]
    %v826 = vld [vmem:[#allocation8 + $0x488] sm:$0xff]
    %v827 = vld [vmem:[#allocation8 + $0x490] sm:$0xff]
    %v828 = vld [vmem:[#allocation8 + $0x498] sm:$0xff]
    %v829 = vld [vmem:[#allocation8 + $0x4a0] sm:$0xff]
    %v830 = vld [vmem:[#allocation8 + $0x4a8] sm:$0xff]
    %v831 = vld [vmem:[#allocation8 + $0x4b0] sm:$0xff]
    %v832 = vld [vmem:[#allocation8 + $0x4b8] sm:$0xff]
    %v833 = vld [vmem:[#allocation8 + $0x4c0] sm:$0xff]
    %v834 = vld [vmem:[#allocation8 + $0x4c8] sm:$0xff]
    %v835 = vld [vmem:[#allocation8 + $0x4d0] sm:$0xff]
    %v836 = vld [vmem:[#allocation8 + $0x4d8] sm:$0xff]
    %v837 = vld [vmem:[#allocation8 + $0x4e0] sm:$0xff]
    %v838 = vld [vmem:[#allocation8 + $0x4e8] sm:$0xff]
    %v839 = vld [vmem:[#allocation8 + $0x4f0] sm:$0xff]
    %v840 = vld [vmem:[#allocation8 + $0x4f8] sm:$0xff]
    %v841 = vld [vmem:[#allocation8 + $0x500] sm:$0xff]
    %v842 = vld [vmem:[#allocation8 + $0x508] sm:$0xff]
    %v843 = vld [vmem:[#allocation8 + $0x510] sm:$0xff]
    %v844 = vld [vmem:[#allocation8 + $0x518] sm:$0xff]
    %v845 = vld [vmem:[#allocation8 + $0x520] sm:$0xff]
    %v846 = vld [vmem:[#allocation8 + $0x528] sm:$0xff]
    %v847 = vld [vmem:[#allocation8 + $0x530] sm:$0xff]
    %v848 = vld [vmem:[#allocation8 + $0x538] sm:$0xff]
    %v849 = vld [vmem:[#allocation8 + $0x540] sm:$0xff]
    %v850 = vld [vmem:[#allocation8 + $0x548] sm:$0xff]
    %v851 = vld [vmem:[#allocation8 + $0x550] sm:$0xff]
    %v852 = vld [vmem:[#allocation8 + $0x558] sm:$0xff]
    %v853 = vld [vmem:[#allocation8 + $0x560] sm:$0xff]
    %v854 = vld [vmem:[#allocation8 + $0x568] sm:$0xff]
    %v855 = vld [vmem:[#allocation8 + $0x570] sm:$0xff]
    %v856 = vld [vmem:[#allocation8 + $0x578] sm:$0xff]
    %v857 = vld [vmem:[#allocation8 + $0x580] sm:$0xff]
    %v858 = vld [vmem:[#allocation8 + $0x588] sm:$0xff]
    %v859 = vld [vmem:[#allocation8 + $0x590] sm:$0xff]
    %v860 = vld [vmem:[#allocation8 + $0x598] sm:$0xff]
    %v861 = vld [vmem:[#allocation8 + $0x5a0] sm:$0xff]
    %v862 = vld [vmem:[#allocation8 + $0x5a8] sm:$0xff]
    %v863 = vld [vmem:[#allocation8 + $0x5b0] sm:$0xff]
    %v864 = vld [vmem:[#allocation8 + $0x5b8] sm:$0xff]
    %v865 = vld [vmem:[#allocation8 + $0x5c0] sm:$0xff]
    %v866 = vld [vmem:[#allocation8 + $0x5c8] sm:$0xff]
    %v867 = vld [vmem:[#allocation8 + $0x5d0] sm:$0xff]
    %v868 = vld [vmem:[#allocation8 + $0x5d8] sm:$0xff]
    %v869 = vld [vmem:[#allocation8 + $0x5e0] sm:$0xff]
    %v870 = vld [vmem:[#allocation8 + $0x5e8] sm:$0xff]
    %v871 = vld [vmem:[#allocation8 + $0x5f0] sm:$0xff]
    %v872 = vld [vmem:[#allocation8 + $0x5f8] sm:$0xff]
    %v873 = vld [vmem:[#allocation8 + $0x600] sm:$0xff]
    %v874 = vld [vmem:[#allocation8 + $0x608] sm:$0xff]
    %v875 = vld [vmem:[#allocation8 + $0x610] sm:$0xff]
    %v876 = vld [vmem:[#allocation8 + $0x618] sm:$0xff]
    %v877 = vld [vmem:[#allocation8 + $0x620] sm:$0xff]
    %v878 = vld [vmem:[#allocation8 + $0x628] sm:$0xff]
    %v879 = vld [vmem:[#allocation8 + $0x630] sm:$0xff]
    %v880 = vld [vmem:[#allocation8 + $0x638] sm:$0xff]
    %v881 = vld [vmem:[#allocation8 + $0x640] sm:$0xff]
    %v882 = vld [vmem:[#allocation8 + $0x648] sm:$0xff]
    %v883 = vld [vmem:[#allocation8 + $0x650] sm:$0xff]
    %v884 = vld [vmem:[#allocation8 + $0x658] sm:$0xff]
    %v885 = vld [vmem:[#allocation8 + $0x660] sm:$0xff]
    %v886 = vld [vmem:[#allocation8 + $0x668] sm:$0xff]
    %v887 = vld [vmem:[#allocation8 + $0x670] sm:$0xff]
    %v888 = vld [vmem:[#allocation8 + $0x678] sm:$0xff]
    %v889 = vld [vmem:[#allocation8 + $0x680] sm:$0xff]
    %v890 = vld [vmem:[#allocation8 + $0x688] sm:$0xff]
    %v891 = vld [vmem:[#allocation8 + $0x690] sm:$0xff]
    %v892 = vld [vmem:[#allocation8 + $0x698] sm:$0xff]
    %v893 = vld [vmem:[#allocation8 + $0x6a0] sm:$0xff]
    %v894 = vld [vmem:[#allocation8 + $0x6a8] sm:$0xff]
    %v895 = vld [vmem:[#allocation8 + $0x6b0] sm:$0xff]
    %v896 = vld [vmem:[#allocation8 + $0x6b8] sm:$0xff]
    %v897 = vld [vmem:[#allocation8 + $0x6c0] sm:$0xff]
    %v898 = vld [vmem:[#allocation8 + $0x6c8] sm:$0xff]
    %v899 = vld [vmem:[#allocation8 + $0x6d0] sm:$0xff]
    %v900 = vld [vmem:[#allocation8 + $0x6d8] sm:$0xff]
    %v901 = vld [vmem:[#allocation8 + $0x6e0] sm:$0xff]
    %v902 = vld [vmem:[#allocation8 + $0x6e8] sm:$0xff]
    %v903 = vld [vmem:[#allocation8 + $0x6f0] sm:$0xff]
    %v904 = vld [vmem:[#allocation8 + $0x6f8] sm:$0xff]
    %v905 = vld [vmem:[#allocation8 + $0x700] sm:$0xff]
    %v906 = vld [vmem:[#allocation8 + $0x708] sm:$0xff]
    %v907 = vld [vmem:[#allocation8 + $0x710] sm:$0xff]
    %v908 = vld [vmem:[#allocation8 + $0x718] sm:$0xff]
    %v909 = vld [vmem:[#allocation8 + $0x720] sm:$0xff]
    %v910 = vld [vmem:[#allocation8 + $0x728] sm:$0xff]
    %v911 = vld [vmem:[#allocation8 + $0x730] sm:$0xff]
    %v912 = vld [vmem:[#allocation8 + $0x738] sm:$0xff]
    %v913 = vld [vmem:[#allocation8 + $0x740] sm:$0xff]
    %v914 = vld [vmem:[#allocation8 + $0x748] sm:$0xff]
    %v915 = vld [vmem:[#allocation8 + $0x750] sm:$0xff]
    %v916 = vld [vmem:[#allocation8 + $0x758] sm:$0xff]
    %v917 = vld [vmem:[#allocation8 + $0x760] sm:$0xff]
    %v918 = vld [vmem:[#allocation8 + $0x768] sm:$0xff]
    %v919 = vld [vmem:[#allocation8 + $0x770] sm:$0xff]
    %v920 = vld [vmem:[#allocation8 + $0x778] sm:$0xff]
    %v921 = vld [vmem:[#allocation8 + $0x780] sm:$0xff]
    %v922 = vld [vmem:[#allocation8 + $0x788] sm:$0xff]
    %v923 = vld [vmem:[#allocation8 + $0x790] sm:$0xff]
    %v924 = vld [vmem:[#allocation8 + $0x798] sm:$0xff]
    %v925 = vld [vmem:[#allocation8 + $0x7a0] sm:$0xff]
    %v926 = vld [vmem:[#allocation8 + $0x7a8] sm:$0xff]
    %v927 = vld [vmem:[#allocation8 + $0x7b0] sm:$0xff]
    %v928 = vld [vmem:[#allocation8 + $0x7b8] sm:$0xff]
    %v929 = vld [vmem:[#allocation8 + $0x7c0] sm:$0xff]
    %v930 = vld [vmem:[#allocation8 + $0x7c8] sm:$0xff]
    %v931 = vld [vmem:[#allocation8 + $0x7d0] sm:$0xff]
    %v932 = vld [vmem:[#allocation8 + $0x7d8] sm:$0xff]
    %v933 = vld [vmem:[#allocation8 + $0x7e0] sm:$0xff]
    %v934 = vld [vmem:[#allocation8 + $0x7e8] sm:$0xff]
    %v935 = vld [vmem:[#allocation8 + $0x7f0] sm:$0xff]
    %v936 = vld [vmem:[#allocation8 + $0x7f8] sm:$0xff]
    %v937 = vld [vmem:[#allocation8 + $0x800] sm:$0xff]
    %v938 = vld [vmem:[#allocation8 + $0x808] sm:$0xff]
    %v939 = vld [vmem:[#allocation8 + $0x810] sm:$0xff]
    %v940 = vld [vmem:[#allocation8 + $0x818] sm:$0xff]
    %v941 = vld [vmem:[#allocation8 + $0x820] sm:$0xff]
    %v942 = vld [vmem:[#allocation8 + $0x828] sm:$0xff]
    %v943 = vld [vmem:[#allocation8 + $0x830] sm:$0xff]
    %v944 = vld [vmem:[#allocation8 + $0x838] sm:$0xff]
    %v945 = vld [vmem:[#allocation8 + $0x840] sm:$0xff]
    %v946 = vld [vmem:[#allocation8 + $0x848] sm:$0xff]
    %v947 = vld [vmem:[#allocation8 + $0x850] sm:$0xff]
    %v948 = vld [vmem:[#allocation8 + $0x858] sm:$0xff]
    %v949 = vld [vmem:[#allocation8 + $0x860] sm:$0xff]
    %v950 = vld [vmem:[#allocation8 + $0x868] sm:$0xff]
    %v951 = vld [vmem:[#allocation8 + $0x870] sm:$0xff]
    %v952 = vld [vmem:[#allocation8 + $0x878] sm:$0xff]
    %v953 = vld [vmem:[#allocation8 + $0x880] sm:$0xff]
    %v954 = vld [vmem:[#allocation8 + $0x888] sm:$0xff]
    %v955 = vld [vmem:[#allocation8 + $0x890] sm:$0xff]
    %v956 = vld [vmem:[#allocation8 + $0x898] sm:$0xff]
    %v957 = vld [vmem:[#allocation8 + $0x8a0] sm:$0xff]
    %v958 = vld [vmem:[#allocation8 + $0x8a8] sm:$0xff]
    %v959 = vld [vmem:[#allocation8 + $0x8b0] sm:$0xff]
    %v960 = vld [vmem:[#allocation8 + $0x8b8] sm:$0xff]
    %v961 = vld [vmem:[#allocation8 + $0x8c0] sm:$0xff]
    %v962 = vld [vmem:[#allocation8 + $0x8c8] sm:$0xff]
    %v963 = vld [vmem:[#allocation8 + $0x8d0] sm:$0xff]
    %v964 = vld [vmem:[#allocation8 + $0x8d8] sm:$0xff]
    %v965 = vld [vmem:[#allocation8 + $0x8e0] sm:$0xff]
    %v966 = vld [vmem:[#allocation8 + $0x8e8] sm:$0xff]
    %v967 = vld [vmem:[#allocation8 + $0x8f0] sm:$0xff]
    %v968 = vld [vmem:[#allocation8 + $0x8f8] sm:$0xff]
    %v969 = vld [vmem:[#allocation8 + $0x900] sm:$0xff]
    %v970 = vld [vmem:[#allocation8 + $0x908] sm:$0xff]
    %v971 = vld [vmem:[#allocation8 + $0x910] sm:$0xff]
    %v972 = vld [vmem:[#allocation8 + $0x918] sm:$0xff]
    %v973 = vld [vmem:[#allocation8 + $0x920] sm:$0xff]
    %v974 = vld [vmem:[#allocation8 + $0x928] sm:$0xff]
    %v975 = vld [vmem:[#allocation8 + $0x930] sm:$0xff]
    %v976 = vld [vmem:[#allocation8 + $0x938] sm:$0xff]
    %v977 = vld [vmem:[#allocation8 + $0x940] sm:$0xff]
    %v978 = vld [vmem:[#allocation8 + $0x948] sm:$0xff]
    %v979 = vld [vmem:[#allocation8 + $0x950] sm:$0xff]
    %v980 = vld [vmem:[#allocation8 + $0x958] sm:$0xff]
    %v981 = vld [vmem:[#allocation8 + $0x960] sm:$0xff]
    %v982 = vld [vmem:[#allocation8 + $0x968] sm:$0xff]
    %v983 = vld [vmem:[#allocation8 + $0x970] sm:$0xff]
    %v984 = vld [vmem:[#allocation8 + $0x978] sm:$0xff]
    %v985 = vld [vmem:[#allocation8 + $0x980] sm:$0xff]
    %v986 = vld [vmem:[#allocation8 + $0x988] sm:$0xff]
    %v987 = vld [vmem:[#allocation8 + $0x990] sm:$0xff]
    %v988 = vld [vmem:[#allocation8 + $0x998] sm:$0xff]
    %v989 = vld [vmem:[#allocation8 + $0x9a0] sm:$0xff]
    %v990 = vld [vmem:[#allocation8 + $0x9a8] sm:$0xff]
    %v991 = vld [vmem:[#allocation8 + $0x9b0] sm:$0xff]
    %v992 = vld [vmem:[#allocation8 + $0x9b8] sm:$0xff]
    %v993 = vld [vmem:[#allocation8 + $0x9c0] sm:$0xff]
    %v994 = vld [vmem:[#allocation8 + $0x9c8] sm:$0xff]
    %v995 = vld [vmem:[#allocation8 + $0x9d0] sm:$0xff]
    %v996 = vld [vmem:[#allocation8 + $0x9d8] sm:$0xff]
    %v997 = vld [vmem:[#allocation8 + $0x9e0] sm:$0xff]
    %v998 = vld [vmem:[#allocation8 + $0x9e8] sm:$0xff]
    %v999 = vld [vmem:[#allocation8 + $0x9f0] sm:$0xff]
    %v1000 = vld [vmem:[#allocation8 + $0x9f8] sm:$0xff]
    %v1001 = vld [vmem:[#allocation8 + $0xa00] sm:$0xff]
    %v1002 = vld [vmem:[#allocation8 + $0xa08] sm:$0xff]
    %v1003 = vld [vmem:[#allocation8 + $0xa10] sm:$0xff]
    %v1004 = vld [vmem:[#allocation8 + $0xa18] sm:$0xff]
    %v1005 = vld [vmem:[#allocation8 + $0xa20] sm:$0xff]
    %v1006 = vld [vmem:[#allocation8 + $0xa28] sm:$0xff]
    %v1007 = vld [vmem:[#allocation8 + $0xa30] sm:$0xff]
    %v1008 = vld [vmem:[#allocation8 + $0xa38] sm:$0xff]
    %v1009 = vld [vmem:[#allocation8 + $0xa40] sm:$0xff]
    %v1010 = vld [vmem:[#allocation8 + $0xa48] sm:$0xff]
    %v1011 = vld [vmem:[#allocation8 + $0xa50] sm:$0xff]
    %v1012 = vld [vmem:[#allocation8 + $0xa58] sm:$0xff]
    %v1013 = vld [vmem:[#allocation8 + $0xa60] sm:$0xff]
    %v1014 = vld [vmem:[#allocation8 + $0xa68] sm:$0xff]
    %v1015 = vld [vmem:[#allocation8 + $0xa70] sm:$0xff]
    %v1016 = vld [vmem:[#allocation8 + $0xa78] sm:$0xff]
    %v1017 = vld [vmem:[#allocation8 + $0xa80] sm:$0xff]
    %v1018 = vld [vmem:[#allocation8 + $0xa88] sm:$0xff]
    %v1019 = vld [vmem:[#allocation8 + $0xa90] sm:$0xff]
    %v1020 = vld [vmem:[#allocation8 + $0xa98] sm:$0xff]
    %v1021 = vld [vmem:[#allocation8 + $0xaa0] sm:$0xff]
    %v1022 = vld [vmem:[#allocation8 + $0xaa8] sm:$0xff]
    %v1023 = vld [vmem:[#allocation8 + $0xab0] sm:$0xff]
    %v1024 = vld [vmem:[#allocation8 + $0xab8] sm:$0xff]
    %v1025 = vld [vmem:[#allocation8 + $0xac0] sm:$0xff]
    %v1026 = vld [vmem:[#allocation8 + $0xac8] sm:$0xff]
    %v1027 = vld [vmem:[#allocation8 + $0xad0] sm:$0xff]
    %v1028 = vld [vmem:[#allocation8 + $0xad8] sm:$0xff]
    %v1029 = vld [vmem:[#allocation8 + $0xae0] sm:$0xff]
    %v1030 = vld [vmem:[#allocation8 + $0xae8] sm:$0xff]
    %v1031 = vld [vmem:[#allocation8 + $0xaf0] sm:$0xff]
    %v1032 = vld [vmem:[#allocation8 + $0xaf8] sm:$0xff]
    %v1033 = vld [vmem:[#allocation8 + $0xb00] sm:$0xff]
    %v1034 = vld [vmem:[#allocation8 + $0xb08] sm:$0xff]
    %v1035 = vld [vmem:[#allocation8 + $0xb10] sm:$0xff]
    %v1036 = vld [vmem:[#allocation8 + $0xb18] sm:$0xff]
    %v1037 = vld [vmem:[#allocation8 + $0xb20] sm:$0xff]
    %v1038 = vld [vmem:[#allocation8 + $0xb28] sm:$0xff]
    %v1039 = vld [vmem:[#allocation8 + $0xb30] sm:$0xff]
    %v1040 = vld [vmem:[#allocation8 + $0xb38] sm:$0xff]
    %v1041 = vld [vmem:[#allocation8 + $0xb40] sm:$0xff]
    %v1042 = vld [vmem:[#allocation8 + $0xb48] sm:$0xff]
    %v1043 = vld [vmem:[#allocation8 + $0xb50] sm:$0xff]
    %v1044 = vld [vmem:[#allocation8 + $0xb58] sm:$0xff]
    %v1045 = vld [vmem:[#allocation8 + $0xb60] sm:$0xff]
    %v1046 = vld [vmem:[#allocation8 + $0xb68] sm:$0xff]
    %v1047 = vld [vmem:[#allocation8 + $0xb70] sm:$0xff]
    %v1048 = vld [vmem:[#allocation8 + $0xb78] sm:$0xff]
    %v1049 = vld [vmem:[#allocation8 + $0xb80] sm:$0xff]
    %v1050 = vld [vmem:[#allocation8 + $0xb88] sm:$0xff]
    %v1051 = vld [vmem:[#allocation8 + $0xb90] sm:$0xff]
    %v1052 = vld [vmem:[#allocation8 + $0xb98] sm:$0xff]
    %v1053 = vld [vmem:[#allocation8 + $0xba0] sm:$0xff]
    %v1054 = vld [vmem:[#allocation8 + $0xba8] sm:$0xff]
    %v1055 = vld [vmem:[#allocation8 + $0xbb0] sm:$0xff]
    %v1056 = vld [vmem:[#allocation8 + $0xbb8] sm:$0xff]
    %v1057 = vld [vmem:[#allocation8 + $0xbc0] sm:$0xff]
    %v1058 = vld [vmem:[#allocation8 + $0xbc8] sm:$0xff]
    %v1059 = vld [vmem:[#allocation8 + $0xbd0] sm:$0xff]
    %v1060 = vld [vmem:[#allocation8 + $0xbd8] sm:$0xff]
    %v1061 = vld [vmem:[#allocation8 + $0xbe0] sm:$0xff]
    %v1062 = vld [vmem:[#allocation8 + $0xbe8] sm:$0xff]
    %v1063 = vld [vmem:[#allocation8 + $0xbf0] sm:$0xff]
    %v1064 = vld [vmem:[#allocation8 + $0xbf8] sm:$0xff]
    %v1065 = vld [vmem:[#allocation8 + $0xc00] sm:$0xff]
    %v1066 = vld [vmem:[#allocation8 + $0xc08] sm:$0xff]
    %v1067 = vld [vmem:[#allocation8 + $0xc10] sm:$0xff]
    %v1068 = vld [vmem:[#allocation8 + $0xc18] sm:$0xff]
    %v1069 = vld [vmem:[#allocation8 + $0xc20] sm:$0xff]
    %v1070 = vld [vmem:[#allocation8 + $0xc28] sm:$0xff]
    %v1071 = vld [vmem:[#allocation8 + $0xc30] sm:$0xff]
    %v1072 = vld [vmem:[#allocation8 + $0xc38] sm:$0xff]
    %v1073 = vld [vmem:[#allocation8 + $0xc40] sm:$0xff]
    %v1074 = vld [vmem:[#allocation8 + $0xc48] sm:$0xff]
    %v1075 = vld [vmem:[#allocation8 + $0xc50] sm:$0xff]
    %v1076 = vld [vmem:[#allocation8 + $0xc58] sm:$0xff]
    %v1077 = vld [vmem:[#allocation8 + $0xc60] sm:$0xff]
    %v1078 = vld [vmem:[#allocation8 + $0xc68] sm:$0xff]
    %v1079 = vld [vmem:[#allocation8 + $0xc70] sm:$0xff]
    %v1080 = vld [vmem:[#allocation8 + $0xc78] sm:$0xff]
    %v1081 = vld [vmem:[#allocation8 + $0xc80] sm:$0xff]
    %v1082 = vld [vmem:[#allocation8 + $0xc88] sm:$0xff]
    %v1083 = vld [vmem:[#allocation8 + $0xc90] sm:$0xff]
    %v1084 = vld [vmem:[#allocation8 + $0xc98] sm:$0xff]
    %v1085 = vld [vmem:[#allocation8 + $0xca0] sm:$0xff]
    %v1086 = vld [vmem:[#allocation8 + $0xca8] sm:$0xff]
    %v1087 = vld [vmem:[#allocation8 + $0xcb0] sm:$0xff]
    %v1088 = vld [vmem:[#allocation8 + $0xcb8] sm:$0xff]
    %v1089 = vld [vmem:[#allocation8 + $0xcc0] sm:$0xff]
    %v1090 = vld [vmem:[#allocation8 + $0xcc8] sm:$0xff]
    %v1091 = vld [vmem:[#allocation8 + $0xcd0] sm:$0xff]
    %v1092 = vld [vmem:[#allocation8 + $0xcd8] sm:$0xff]
    %v1093 = vld [vmem:[#allocation8 + $0xce0] sm:$0xff]
    %v1094 = vld [vmem:[#allocation8 + $0xce8] sm:$0xff]
    %v1095 = vld [vmem:[#allocation8 + $0xcf0] sm:$0xff]
    %v1096 = vld [vmem:[#allocation8 + $0xcf8] sm:$0xff]
    %v1097 = vld [vmem:[#allocation8 + $0xd00] sm:$0xff]
    %v1098 = vld [vmem:[#allocation8 + $0xd08] sm:$0xff]
    %v1099 = vld [vmem:[#allocation8 + $0xd10] sm:$0xff]
    %v1100 = vld [vmem:[#allocation8 + $0xd18] sm:$0xff]
    %v1101 = vld [vmem:[#allocation8 + $0xd20] sm:$0xff]
    %v1102 = vld [vmem:[#allocation8 + $0xd28] sm:$0xff]
    %v1103 = vld [vmem:[#allocation8 + $0xd30] sm:$0xff]
    %v1104 = vld [vmem:[#allocation8 + $0xd38] sm:$0xff]
    %v1105 = vld [vmem:[#allocation8 + $0xd40] sm:$0xff]
    %v1106 = vld [vmem:[#allocation8 + $0xd48] sm:$0xff]
    %v1107 = vld [vmem:[#allocation8 + $0xd50] sm:$0xff]
    %v1108 = vld [vmem:[#allocation8 + $0xd58] sm:$0xff]
    %v1109 = vld [vmem:[#allocation8 + $0xd60] sm:$0xff]
    %v1110 = vld [vmem:[#allocation8 + $0xd68] sm:$0xff]
    %v1111 = vld [vmem:[#allocation8 + $0xd70] sm:$0xff]
    %v1112 = vld [vmem:[#allocation8 + $0xd78] sm:$0xff]
    %v1113 = vld [vmem:[#allocation8 + $0xd80] sm:$0xff]
    %v1114 = vld [vmem:[#allocation8 + $0xd88] sm:$0xff]
    %v1115 = vld [vmem:[#allocation8 + $0xd90] sm:$0xff]
    %v1116 = vld [vmem:[#allocation8 + $0xd98] sm:$0xff]
    %v1117 = vld [vmem:[#allocation8 + $0xda0] sm:$0xff]
    %v1118 = vld [vmem:[#allocation8 + $0xda8] sm:$0xff]
    %v1119 = vld [vmem:[#allocation8 + $0xdb0] sm:$0xff]
    %v1120 = vld [vmem:[#allocation8 + $0xdb8] sm:$0xff]
    %v1121 = vld [vmem:[#allocation8 + $0xdc0] sm:$0xff]
    %v1122 = vld [vmem:[#allocation8 + $0xdc8] sm:$0xff]
    %v1123 = vld [vmem:[#allocation8 + $0xdd0] sm:$0xff]
    %v1124 = vld [vmem:[#allocation8 + $0xdd8] sm:$0xff]
    %v1125 = vld [vmem:[#allocation8 + $0xde0] sm:$0xff]
    %v1126 = vld [vmem:[#allocation8 + $0xde8] sm:$0xff]
    %v1127 = vld [vmem:[#allocation8 + $0xdf0] sm:$0xff]
    %v1128 = vld [vmem:[#allocation8 + $0xdf8] sm:$0xff]
    %v1129 = vld [vmem:[#allocation8 + $0xe00] sm:$0xff]
    %v1130 = vld [vmem:[#allocation8 + $0xe08] sm:$0xff]
    %v1131 = vld [vmem:[#allocation8 + $0xe10] sm:$0xff]
    %v1132 = vld [vmem:[#allocation8 + $0xe18] sm:$0xff]
    %v1133 = vld [vmem:[#allocation8 + $0xe20] sm:$0xff]
    %v1134 = vld [vmem:[#allocation8 + $0xe28] sm:$0xff]
    %v1135 = vld [vmem:[#allocation8 + $0xe30] sm:$0xff]
    %v1136 = vld [vmem:[#allocation8 + $0xe38] sm:$0xff]
    %v1137 = vld [vmem:[#allocation8 + $0xe40] sm:$0xff]
    %v1138 = vld [vmem:[#allocation8 + $0xe48] sm:$0xff]
    %v1139 = vld [vmem:[#allocation8 + $0xe50] sm:$0xff]
    %v1140 = vld [vmem:[#allocation8 + $0xe58] sm:$0xff]
    %v1141 = vld [vmem:[#allocation8 + $0xe60] sm:$0xff]
    %v1142 = vld [vmem:[#allocation8 + $0xe68] sm:$0xff]
    %v1143 = vld [vmem:[#allocation8 + $0xe70] sm:$0xff]
    %v1144 = vld [vmem:[#allocation8 + $0xe78] sm:$0xff]
    %v1145 = vld [vmem:[#allocation8 + $0xe80] sm:$0xff]
    %v1146 = vld [vmem:[#allocation8 + $0xe88] sm:$0xff]
    %v1147 = vld [vmem:[#allocation8 + $0xe90] sm:$0xff]
    %v1148 = vld [vmem:[#allocation8 + $0xe98] sm:$0xff]
    %v1149 = vld [vmem:[#allocation8 + $0xea0] sm:$0xff]
    %v1150 = vld [vmem:[#allocation8 + $0xea8] sm:$0xff]
    %v1151 = vld [vmem:[#allocation8 + $0xeb0] sm:$0xff]
    %v1152 = vld [vmem:[#allocation8 + $0xeb8] sm:$0xff]
    %v1153 = vld [vmem:[#allocation8 + $0xec0] sm:$0xff]
    %v1154 = vld [vmem:[#allocation8 + $0xec8] sm:$0xff]
    %v1155 = vld [vmem:[#allocation8 + $0xed0] sm:$0xff]
    %v1156 = vld [vmem:[#allocation8 + $0xed8] sm:$0xff]
    %v1157 = vld [vmem:[#allocation8 + $0xee0] sm:$0xff]
    %v1158 = vld [vmem:[#allocation8 + $0xee8] sm:$0xff]
    %v1159 = vld [vmem:[#allocation8 + $0xef0] sm:$0xff]
    %v1160 = vld [vmem:[#allocation8 + $0xef8] sm:$0xff]
    %v1161 = vld [vmem:[#allocation8 + $0xf00] sm:$0xff]
    %v1162 = vld [vmem:[#allocation8 + $0xf08] sm:$0xff]
    %v1163 = vld [vmem:[#allocation8 + $0xf10] sm:$0xff]
    %v1164 = vld [vmem:[#allocation8 + $0xf18] sm:$0xff]
    %v1165 = vld [vmem:[#allocation8 + $0xf20] sm:$0xff]
    %v1166 = vld [vmem:[#allocation8 + $0xf28] sm:$0xff]
    %v1167 = vld [vmem:[#allocation8 + $0xf30] sm:$0xff]
    %v1168 = vld [vmem:[#allocation8 + $0xf38] sm:$0xff]
    %v1169 = vld [vmem:[#allocation8 + $0xf40] sm:$0xff]
    %v1170 = vld [vmem:[#allocation8 + $0xf48] sm:$0xff]
    %v1171 = vld [vmem:[#allocation8 + $0xf50] sm:$0xff]
    %v1172 = vld [vmem:[#allocation8 + $0xf58] sm:$0xff]
    %v1173 = vld [vmem:[#allocation8 + $0xf60] sm:$0xff]
    %v1174 = vld [vmem:[#allocation8 + $0xf68] sm:$0xff]
    %v1175 = vld [vmem:[#allocation8 + $0xf70] sm:$0xff]
    %v1176 = vld [vmem:[#allocation8 + $0xf78] sm:$0xff]
    %v1177 = vld [vmem:[#allocation8 + $0xf80] sm:$0xff]
    %v1178 = vld [vmem:[#allocation8 + $0xf88] sm:$0xff]
    %v1179 = vld [vmem:[#allocation8 + $0xf90] sm:$0xff]
    %v1180 = vld [vmem:[#allocation8 + $0xf98] sm:$0xff]
    %v1181 = vld [vmem:[#allocation8 + $0xfa0] sm:$0xff]
    %v1182 = vld [vmem:[#allocation8 + $0xfa8] sm:$0xff]
    %v1183 = vld [vmem:[#allocation8 + $0xfb0] sm:$0xff]
    %v1184 = vld [vmem:[#allocation8 + $0xfb8] sm:$0xff]
    %v1185 = vld [vmem:[#allocation8 + $0xfc0] sm:$0xff]
    %v1186 = vld [vmem:[#allocation8 + $0xfc8] sm:$0xff]
    %v1187 = vld [vmem:[#allocation8 + $0xfd0] sm:$0xff]
    %v1188 = vld [vmem:[#allocation8 + $0xfd8] sm:$0xff]
    %v1189 = vld [vmem:[#allocation8 + $0xfe0] sm:$0xff]
    %v1190 = vld [vmem:[#allocation8 + $0xfe8] sm:$0xff]
    %v1191 = vld [vmem:[#allocation8 + $0xff0] sm:$0xff]
    %v1192 = vld [vmem:[#allocation8 + $0xff8] sm:$0xff]
    %v1193 = vld [vmem:[#allocation8 + $0x1000] sm:$0x1]
    %v1194 = vld [vmem:[#allocation8 + $0x1008] sm:$0x1]
    %v1195 = vld [vmem:[#allocation8 + $0x1010] sm:$0x1]
    %v1196 = vld [vmem:[#allocation8 + $0x1018] sm:$0x1]
    %v1197 = vlaneseq
    %v1198 = vshrl.u32 %v1197, 7
    %v1199 = vsub.s32 0, %v1198
    %v1200 = vrot.slane %v1193, %v1199
    %v1201 = vlaneseq
    %v1202 = vshrl.u32 %v1201, 7
    %v1203 = vsub.s32 0, %v1202
    %v1204 = vrot.slane %v1194, %v1203
    %v1205 = vlaneseq
    %v1206 = vshrl.u32 %v1205, 7
    %v1207 = vsub.s32 0, %v1206
    %v1208 = vrot.slane %v1195, %v1207
    %v1209 = vlaneseq
    %v1210 = vshrl.u32 %v1209, 7
    %v1211 = vsub.s32 0, %v1210
    %v1212 = vrot.slane %v1196, %v1211
    %1213 = vmatprep.subr.mxu0 %v682
    %1214 = vmatpush1.msra.mxu0 %v681
    %1215 = vmatprep.subr.mxu0 %v686
    %1216 = vmatpush1.msra.mxu0 %v685
    %1217 = vmatprep.subr.mxu0 %v690
    %1218 = vmatpush1.msra.mxu0 %v689
    %1219 = vmatprep.subr.mxu0 %v694
    %1220 = vmatpush1.msra.mxu0 %v693
    %1221 = vmatprep.subr.mxu0 %v698
    %1222 = vmatpush1.msra.mxu0 %v697
    %1223 = vmatprep.subr.mxu0 %v702
    %1224 = vmatpush1.msra.mxu0 %v701
    %1225 = vmatprep.subr.mxu0 %v706
    %1226 = vmatpush1.msra.mxu0 %v705
    %1227 = vmatprep.subr.mxu0 %v710
    %1228 = vmatpush1.msra.mxu0 %v709
    %1229 = vmatprep.subr.mxu0 %v714
    %1230 = vmatpush1.msra.mxu0 %v713
    %1231 = vmatprep.subr.mxu0 %v718
    %1232 = vmatpush1.msra.mxu0 %v717
    %1233 = vmatprep.subr.mxu0 %v722
    %1234 = vmatpush1.msra.mxu0 %v721
    %1235 = vmatprep.subr.mxu0 %v726
    %1236 = vmatpush1.msra.mxu0 %v725
    %1237 = vmatprep.subr.mxu0 %v730
    %1238 = vmatpush1.msra.mxu0 %v729
    %1239 = vmatprep.subr.mxu0 %v734
    %1240 = vmatpush1.msra.mxu0 %v733
    %1241 = vmatprep.subr.mxu0 %v738
    %1242 = vmatpush1.msra.mxu0 %v737
    %1243 = vmatprep.subr.mxu0 %v742
    %1244 = vmatpush1.msra.mxu0 %v741
    %1245 = vmatprep.subr.mxu0 %v746
    %1246 = vmatpush1.msra.mxu0 %v745
    %1247 = vmatprep.subr.mxu0 %v750
    %1248 = vmatpush1.msra.mxu0 %v749
    %1249 = vmatprep.subr.mxu0 %v754
    %1250 = vmatpush1.msra.mxu0 %v753
    %1251 = vmatprep.subr.mxu0 %v758
    %1252 = vmatpush1.msra.mxu0 %v757
    %1253 = vmatprep.subr.mxu0 %v762
    %1254 = vmatpush1.msra.mxu0 %v761
    %1255 = vmatprep.subr.mxu0 %v766
    %1256 = vmatpush1.msra.mxu0 %v765
    %1257 = vmatprep.subr.mxu0 %v770
    %1258 = vmatpush1.msra.mxu0 %v769
    %1259 = vmatprep.subr.mxu0 %v774
    %1260 = vmatpush1.msra.mxu0 %v773
    %1261 = vmatprep.subr.mxu0 %v778
    %1262 = vmatpush1.msra.mxu0 %v777
    %1263 = vmatprep.subr.mxu0 %v782
    %1264 = vmatpush1.msra.mxu0 %v781
    %1265 = vmatprep.subr.mxu0 %v786
    %1266 = vmatpush1.msra.mxu0 %v785
    %1267 = vmatprep.subr.mxu0 %v790
    %1268 = vmatpush1.msra.mxu0 %v789
    %1269 = vmatprep.subr.mxu0 %v794
    %1270 = vmatpush1.msra.mxu0 %v793
    %1271 = vmatprep.subr.mxu0 %v798
    %1272 = vmatpush1.msra.mxu0 %v797
    %1273 = vmatprep.subr.mxu0 %v802
    %1274 = vmatpush1.msra.mxu0 %v801
    %1275 = vmatprep.subr.mxu0 %v806
    %1276 = vmatpush1.msra.mxu0 %v805
    %1277 = vmatprep.mubr.f32.mxu0 %v466
    %1278 = vmatmul.mubr.f32.gmra.mrb[0].mxu0 %v464
    %v1279 = vpop.f32.mrb[0].mxu0
    %v1280 = vadd.f32 %v1200, %v1279
    %v1281 = vpop.f32.mrb[0].mxu0
    %v1282 = vadd.f32 %v1204, %v1281
    %1283 = vdwg.mxu0
    %1284 = vmatprep.subr.mxu0 %v810
    %1285 = vmatpush1.msra.mxu0 %v809
    %1286 = vmatprep.subr.mxu0 %v814
    %1287 = vmatpush1.msra.mxu0 %v813
    %1288 = vmatprep.subr.mxu0 %v818
    %1289 = vmatpush1.msra.mxu0 %v817
    %1290 = vmatprep.subr.mxu0 %v822
    %1291 = vmatpush1.msra.mxu0 %v821
    %1292 = vmatprep.subr.mxu0 %v826
    %1293 = vmatpush1.msra.mxu0 %v825
    %1294 = vmatprep.subr.mxu0 %v830
    %1295 = vmatpush1.msra.mxu0 %v829
    %1296 = vmatprep.subr.mxu0 %v834
    %1297 = vmatpush1.msra.mxu0 %v833
    %1298 = vmatprep.subr.mxu0 %v838
    %1299 = vmatpush1.msra.mxu0 %v837
    %1300 = vmatprep.subr.mxu0 %v842
    %1301 = vmatpush1.msra.mxu0 %v841
    %1302 = vmatprep.subr.mxu0 %v846
    %1303 = vmatpush1.msra.mxu0 %v845
    %1304 = vmatprep.subr.mxu0 %v850
    %1305 = vmatpush1.msra.mxu0 %v849
    %1306 = vmatprep.subr.mxu0 %v854
    %1307 = vmatpush1.msra.mxu0 %v853
    %1308 = vmatprep.subr.mxu0 %v858
    %1309 = vmatpush1.msra.mxu0 %v857
    %1310 = vmatprep.subr.mxu0 %v862
    %1311 = vmatpush1.msra.mxu0 %v861
    %1312 = vmatprep.subr.mxu0 %v866
    %1313 = vmatpush1.msra.mxu0 %v865
    %1314 = vmatprep.subr.mxu0 %v870
    %1315 = vmatpush1.msra.mxu0 %v869
    %1316 = vmatprep.subr.mxu0 %v874
    %1317 = vmatpush1.msra.mxu0 %v873
    %1318 = vmatprep.subr.mxu0 %v878
    %1319 = vmatpush1.msra.mxu0 %v877
    %1320 = vmatprep.subr.mxu0 %v882
    %1321 = vmatpush1.msra.mxu0 %v881
    %1322 = vmatprep.subr.mxu0 %v886
    %1323 = vmatpush1.msra.mxu0 %v885
    %1324 = vmatprep.subr.mxu0 %v890
    %1325 = vmatpush1.msra.mxu0 %v889
    %1326 = vmatprep.subr.mxu0 %v894
    %1327 = vmatpush1.msra.mxu0 %v893
    %1328 = vmatprep.subr.mxu0 %v898
    %1329 = vmatpush1.msra.mxu0 %v897
    %1330 = vmatprep.subr.mxu0 %v902
    %1331 = vmatpush1.msra.mxu0 %v901
    %1332 = vmatprep.subr.mxu0 %v906
    %1333 = vmatpush1.msra.mxu0 %v905
    %1334 = vmatprep.subr.mxu0 %v910
    %1335 = vmatpush1.msra.mxu0 %v909
    %1336 = vmatprep.subr.mxu0 %v914
    %1337 = vmatpush1.msra.mxu0 %v913
    %1338 = vmatprep.subr.mxu0 %v918
    %1339 = vmatpush1.msra.mxu0 %v917
    %1340 = vmatprep.subr.mxu0 %v922
    %1341 = vmatpush1.msra.mxu0 %v921
    %1342 = vmatprep.subr.mxu0 %v926
    %1343 = vmatpush1.msra.mxu0 %v925
    %1344 = vmatprep.subr.mxu0 %v930
    %1345 = vmatpush1.msra.mxu0 %v929
    %1346 = vmatprep.subr.mxu0 %v934
    %1347 = vmatpush1.msra.mxu0 %v933
    %1348 = vmatprep.mubr.f32.mxu0 %v537
    %1349 = vmatmul.mubr.f32.gmra.mrb[0].mxu0 %v535
    %v1350 = vpop.f32.mrb[0].mxu0
    %v1351 = vadd.f32 %v1280, %v1350
    %v1352 = vpop.f32.mrb[0].mxu0
    %v1353 = vadd.f32 %v1282, %v1352
    %1354 = vdwg.mxu0
    %1355 = vmatprep.subr.mxu0 %v938
    %1356 = vmatpush1.msra.mxu0 %v937
    %1357 = vmatprep.subr.mxu0 %v942
    %1358 = vmatpush1.msra.mxu0 %v941
    %1359 = vmatprep.subr.mxu0 %v946
    %1360 = vmatpush1.msra.mxu0 %v945
    %1361 = vmatprep.subr.mxu0 %v950
    %1362 = vmatpush1.msra.mxu0 %v949
    %1363 = vmatprep.subr.mxu0 %v954
    %1364 = vmatpush1.msra.mxu0 %v953
    %1365 = vmatprep.subr.mxu0 %v958
    %1366 = vmatpush1.msra.mxu0 %v957
    %1367 = vmatprep.subr.mxu0 %v962
    %1368 = vmatpush1.msra.mxu0 %v961
    %1369 = vmatprep.subr.mxu0 %v966
    %1370 = vmatpush1.msra.mxu0 %v965
    %1371 = vmatprep.subr.mxu0 %v970
    %1372 = vmatpush1.msra.mxu0 %v969
    %1373 = vmatprep.subr.mxu0 %v974
    %1374 = vmatpush1.msra.mxu0 %v973
    %1375 = vmatprep.subr.mxu0 %v978
    %1376 = vmatpush1.msra.mxu0 %v977
    %1377 = vmatprep.subr.mxu0 %v982
    %1378 = vmatpush1.msra.mxu0 %v981
    %1379 = vmatprep.subr.mxu0 %v986
    %1380 = vmatpush1.msra.mxu0 %v985
    %1381 = vmatprep.subr.mxu0 %v990
    %1382 = vmatpush1.msra.mxu0 %v989
    %1383 = vmatprep.subr.mxu0 %v994
    %1384 = vmatpush1.msra.mxu0 %v993
    %1385 = vmatprep.subr.mxu0 %v998
    %1386 = vmatpush1.msra.mxu0 %v997
    %1387 = vmatprep.subr.mxu0 %v1002
    %1388 = vmatpush1.msra.mxu0 %v1001
    %1389 = vmatprep.subr.mxu0 %v1006
    %1390 = vmatpush1.msra.mxu0 %v1005
    %1391 = vmatprep.subr.mxu0 %v1010
    %1392 = vmatpush1.msra.mxu0 %v1009
    %1393 = vmatprep.subr.mxu0 %v1014
    %1394 = vmatpush1.msra.mxu0 %v1013
    %1395 = vmatprep.subr.mxu0 %v1018
    %1396 = vmatpush1.msra.mxu0 %v1017
    %1397 = vmatprep.subr.mxu0 %v1022
    %1398 = vmatpush1.msra.mxu0 %v1021
    %1399 = vmatprep.subr.mxu0 %v1026
    %1400 = vmatpush1.msra.mxu0 %v1025
    %1401 = vmatprep.subr.mxu0 %v1030
    %1402 = vmatpush1.msra.mxu0 %v1029
    %1403 = vmatprep.subr.mxu0 %v1034
    %1404 = vmatpush1.msra.mxu0 %v1033
    %1405 = vmatprep.subr.mxu0 %v1038
    %1406 = vmatpush1.msra.mxu0 %v1037
    %1407 = vmatprep.subr.mxu0 %v1042
    %1408 = vmatpush1.msra.mxu0 %v1041
    %1409 = vmatprep.subr.mxu0 %v1046
    %1410 = vmatpush1.msra.mxu0 %v1045
    %1411 = vmatprep.subr.mxu0 %v1050
    %1412 = vmatpush1.msra.mxu0 %v1049
    %1413 = vmatprep.subr.mxu0 %v1054
    %1414 = vmatpush1.msra.mxu0 %v1053
    %1415 = vmatprep.subr.mxu0 %v1058
    %1416 = vmatpush1.msra.mxu0 %v1057
    %1417 = vmatprep.subr.mxu0 %v1062
    %1418 = vmatpush1.msra.mxu0 %v1061
    %1419 = vmatprep.mubr.f32.mxu0 %v608
    %1420 = vmatmul.mubr.f32.gmra.mrb[0].mxu0 %v606
    %v1421 = vpop.f32.mrb[0].mxu0
    %v1422 = vadd.f32 %v1351, %v1421
    %v1423 = vpop.f32.mrb[0].mxu0
    %v1424 = vadd.f32 %v1353, %v1423
    %1425 = vdwg.mxu0
    %1426 = vmatprep.subr.mxu0 %v1066
    %1427 = vmatpush1.msra.mxu0 %v1065
    %1428 = vmatprep.subr.mxu0 %v1070
    %1429 = vmatpush1.msra.mxu0 %v1069
    %1430 = vmatprep.subr.mxu0 %v1074
    %1431 = vmatpush1.msra.mxu0 %v1073
    %1432 = vmatprep.subr.mxu0 %v1078
    %1433 = vmatpush1.msra.mxu0 %v1077
    %1434 = vmatprep.subr.mxu0 %v1082
    %1435 = vmatpush1.msra.mxu0 %v1081
    %1436 = vmatprep.subr.mxu0 %v1086
    %1437 = vmatpush1.msra.mxu0 %v1085
    %1438 = vmatprep.subr.mxu0 %v1090
    %1439 = vmatpush1.msra.mxu0 %v1089
    %1440 = vmatprep.subr.mxu0 %v1094
    %1441 = vmatpush1.msra.mxu0 %v1093
    %1442 = vmatprep.subr.mxu0 %v1098
    %1443 = vmatpush1.msra.mxu0 %v1097
    %1444 = vmatprep.subr.mxu0 %v1102
    %1445 = vmatpush1.msra.mxu0 %v1101
    %1446 = vmatprep.subr.mxu0 %v1106
    %1447 = vmatpush1.msra.mxu0 %v1105
    %1448 = vmatprep.subr.mxu0 %v1110
    %1449 = vmatpush1.msra.mxu0 %v1109
    %1450 = vmatprep.subr.mxu0 %v1114
    %1451 = vmatpush1.msra.mxu0 %v1113
    %1452 = vmatprep.subr.mxu0 %v1118
    %1453 = vmatpush1.msra.mxu0 %v1117
    %1454 = vmatprep.subr.mxu0 %v1122
    %1455 = vmatpush1.msra.mxu0 %v1121
    %1456 = vmatprep.subr.mxu0 %v1126
    %1457 = vmatpush1.msra.mxu0 %v1125
    %1458 = vmatprep.subr.mxu0 %v1130
    %1459 = vmatpush1.msra.mxu0 %v1129
    %1460 = vmatprep.subr.mxu0 %v1134
    %1461 = vmatpush1.msra.mxu0 %v1133
    %1462 = vmatprep.subr.mxu0 %v1138
    %1463 = vmatpush1.msra.mxu0 %v1137
    %1464 = vmatprep.subr.mxu0 %v1142
    %1465 = vmatpush1.msra.mxu0 %v1141
    %1466 = vmatprep.subr.mxu0 %v1146
    %1467 = vmatpush1.msra.mxu0 %v1145
    %1468 = vmatprep.subr.mxu0 %v1150
    %1469 = vmatpush1.msra.mxu0 %v1149
    %1470 = vmatprep.subr.mxu0 %v1154
    %1471 = vmatpush1.msra.mxu0 %v1153
    %1472 = vmatprep.subr.mxu0 %v1158
    %1473 = vmatpush1.msra.mxu0 %v1157
    %1474 = vmatprep.subr.mxu0 %v1162
    %1475 = vmatpush1.msra.mxu0 %v1161
    %1476 = vmatprep.subr.mxu0 %v1166
    %1477 = vmatpush1.msra.mxu0 %v1165
    %1478 = vmatprep.subr.mxu0 %v1170
    %1479 = vmatpush1.msra.mxu0 %v1169
    %1480 = vmatprep.subr.mxu0 %v1174
    %1481 = vmatpush1.msra.mxu0 %v1173
    %1482 = vmatprep.subr.mxu0 %v1178
    %1483 = vmatpush1.msra.mxu0 %v1177
    %1484 = vmatprep.subr.mxu0 %v1182
    %1485 = vmatpush1.msra.mxu0 %v1181
    %1486 = vmatprep.subr.mxu0 %v1186
    %1487 = vmatpush1.msra.mxu0 %v1185
    %1488 = vmatprep.subr.mxu0 %v1190
    %1489 = vmatpush1.msra.mxu0 %v1189
    %1490 = vmatprep.mubr.f32.mxu0 %v679
    %1491 = vmatmul.mubr.f32.gmra.mrb[0].mxu0 %v677
    %v1492 = vpop.f32.mrb[0].mxu0
    %v1493 = vadd.f32 %v1422, %v1492
    %v1494 = vpop.f32.mrb[0].mxu0
    %v1495 = vadd.f32 %v1424, %v1494
    %1496 = vdwg.mxu0
    %1497 = vmatprep.subr.mxu0 %v684
    %1498 = vmatpush1.msra.mxu0 %v683
    %1499 = vmatprep.subr.mxu0 %v688
    %1500 = vmatpush1.msra.mxu0 %v687
    %1501 = vmatprep.subr.mxu0 %v692
    %1502 = vmatpush1.msra.mxu0 %v691
    %1503 = vmatprep.subr.mxu0 %v696
    %1504 = vmatpush1.msra.mxu0 %v695
    %1505 = vmatprep.subr.mxu0 %v700
    %1506 = vmatpush1.msra.mxu0 %v699
    %1507 = vmatprep.subr.mxu0 %v704
    %1508 = vmatpush1.msra.mxu0 %v703
    %1509 = vmatprep.subr.mxu0 %v708
    %1510 = vmatpush1.msra.mxu0 %v707
    %1511 = vmatprep.subr.mxu0 %v712
    %1512 = vmatpush1.msra.mxu0 %v711
    %1513 = vmatprep.subr.mxu0 %v716
    %1514 = vmatpush1.msra.mxu0 %v715
    %1515 = vmatprep.subr.mxu0 %v720
    %1516 = vmatpush1.msra.mxu0 %v719
    %1517 = vmatprep.subr.mxu0 %v724
    %1518 = vmatpush1.msra.mxu0 %v723
    %1519 = vmatprep.subr.mxu0 %v728
    %1520 = vmatpush1.msra.mxu0 %v727
    %1521 = vmatprep.subr.mxu0 %v732
    %1522 = vmatpush1.msra.mxu0 %v731
    %1523 = vmatprep.subr.mxu0 %v736
    %1524 = vmatpush1.msra.mxu0 %v735
    %1525 = vmatprep.subr.mxu0 %v740
    %1526 = vmatpush1.msra.mxu0 %v739
    %1527 = vmatprep.subr.mxu0 %v744
    %1528 = vmatpush1.msra.mxu0 %v743
    %1529 = vmatprep.subr.mxu0 %v748
    %1530 = vmatpush1.msra.mxu0 %v747
    %1531 = vmatprep.subr.mxu0 %v752
    %1532 = vmatpush1.msra.mxu0 %v751
    %1533 = vmatprep.subr.mxu0 %v756
    %1534 = vmatpush1.msra.mxu0 %v755
    %1535 = vmatprep.subr.mxu0 %v760
    %1536 = vmatpush1.msra.mxu0 %v759
    %1537 = vmatprep.subr.mxu0 %v764
    %1538 = vmatpush1.msra.mxu0 %v763
    %1539 = vmatprep.subr.mxu0 %v768
    %1540 = vmatpush1.msra.mxu0 %v767
    %1541 = vmatprep.subr.mxu0 %v772
    %1542 = vmatpush1.msra.mxu0 %v771
    %1543 = vmatprep.subr.mxu0 %v776
    %1544 = vmatpush1.msra.mxu0 %v775
    %1545 = vmatprep.subr.mxu0 %v780
    %1546 = vmatpush1.msra.mxu0 %v779
    %1547 = vmatprep.subr.mxu0 %v784
    %1548 = vmatpush1.msra.mxu0 %v783
    %1549 = vmatprep.subr.mxu0 %v788
    %1550 = vmatpush1.msra.mxu0 %v787
    %1551 = vmatprep.subr.mxu0 %v792
    %1552 = vmatpush1.msra.mxu0 %v791
    %1553 = vmatprep.subr.mxu0 %v796
    %1554 = vmatpush1.msra.mxu0 %v795
    %1555 = vmatprep.subr.mxu0 %v800
    %1556 = vmatpush1.msra.mxu0 %v799
    %1557 = vmatprep.subr.mxu0 %v804
    %1558 = vmatpush1.msra.mxu0 %v803
    %1559 = vmatprep.subr.mxu0 %v808
    %1560 = vmatpush1.msra.mxu0 %v807
    %1561 = vmatprep.mubr.f32.mxu0 %v466
    %1562 = vmatmul.mubr.f32.gmra.mrb[0].mxu0 %v464
    %v1563 = vpop.f32.mrb[0].mxu0
    %v1564 = vadd.f32 %v1208, %v1563
    %v1565 = vpop.f32.mrb[0].mxu0
    %v1566 = vadd.f32 %v1212, %v1565
    %1567 = vdwg.mxu0
    %1568 = vmatprep.subr.mxu0 %v812
    %1569 = vmatpush1.msra.mxu0 %v811
    %1570 = vmatprep.subr.mxu0 %v816
    %1571 = vmatpush1.msra.mxu0 %v815
    %1572 = vmatprep.subr.mxu0 %v820
    %1573 = vmatpush1.msra.mxu0 %v819
    %1574 = vmatprep.subr.mxu0 %v824
    %1575 = vmatpush1.msra.mxu0 %v823
    %1576 = vmatprep.subr.mxu0 %v828
    %1577 = vmatpush1.msra.mxu0 %v827
    %1578 = vmatprep.subr.mxu0 %v832
    %1579 = vmatpush1.msra.mxu0 %v831
    %1580 = vmatprep.subr.mxu0 %v836
    %1581 = vmatpush1.msra.mxu0 %v835
    %1582 = vmatprep.subr.mxu0 %v840
    %1583 = vmatpush1.msra.mxu0 %v839
    %1584 = vmatprep.subr.mxu0 %v844
    %1585 = vmatpush1.msra.mxu0 %v843
    %1586 = vmatprep.subr.mxu0 %v848
    %1587 = vmatpush1.msra.mxu0 %v847
    %1588 = vmatprep.subr.mxu0 %v852
    %1589 = vmatpush1.msra.mxu0 %v851
    %1590 = vmatprep.subr.mxu0 %v856
    %1591 = vmatpush1.msra.mxu0 %v855
    %1592 = vmatprep.subr.mxu0 %v860
    %1593 = vmatpush1.msra.mxu0 %v859
    %1594 = vmatprep.subr.mxu0 %v864
    %1595 = vmatpush1.msra.mxu0 %v863
    %1596 = vmatprep.subr.mxu0 %v868
    %1597 = vmatpush1.msra.mxu0 %v867
    %1598 = vmatprep.subr.mxu0 %v872
    %1599 = vmatpush1.msra.mxu0 %v871
    %1600 = vmatprep.subr.mxu0 %v876
    %1601 = vmatpush1.msra.mxu0 %v875
    %1602 = vmatprep.subr.mxu0 %v880
    %1603 = vmatpush1.msra.mxu0 %v879
    %1604 = vmatprep.subr.mxu0 %v884
    %1605 = vmatpush1.msra.mxu0 %v883
    %1606 = vmatprep.subr.mxu0 %v888
    %1607 = vmatpush1.msra.mxu0 %v887
    %1608 = vmatprep.subr.mxu0 %v892
    %1609 = vmatpush1.msra.mxu0 %v891
    %1610 = vmatprep.subr.mxu0 %v896
    %1611 = vmatpush1.msra.mxu0 %v895
    %1612 = vmatprep.subr.mxu0 %v900
    %1613 = vmatpush1.msra.mxu0 %v899
    %1614 = vmatprep.subr.mxu0 %v904
    %1615 = vmatpush1.msra.mxu0 %v903
    %1616 = vmatprep.subr.mxu0 %v908
    %1617 = vmatpush1.msra.mxu0 %v907
    %1618 = vmatprep.subr.mxu0 %v912
    %1619 = vmatpush1.msra.mxu0 %v911
    %1620 = vmatprep.subr.mxu0 %v916
    %1621 = vmatpush1.msra.mxu0 %v915
    %1622 = vmatprep.subr.mxu0 %v920
    %1623 = vmatpush1.msra.mxu0 %v919
    %1624 = vmatprep.subr.mxu0 %v924
    %1625 = vmatpush1.msra.mxu0 %v923
    %1626 = vmatprep.subr.mxu0 %v928
    %1627 = vmatpush1.msra.mxu0 %v927
    %1628 = vmatprep.subr.mxu0 %v932
    %1629 = vmatpush1.msra.mxu0 %v931
    %1630 = vmatprep.subr.mxu0 %v936
    %1631 = vmatpush1.msra.mxu0 %v935
    %1632 = vmatprep.mubr.f32.mxu0 %v537
    %1633 = vmatmul.mubr.f32.gmra.mrb[0].mxu0 %v535
    %v1634 = vpop.f32.mrb[0].mxu0
    %v1635 = vadd.f32 %v1564, %v1634
    %v1636 = vpop.f32.mrb[0].mxu0
    %v1637 = vadd.f32 %v1566, %v1636
    %1638 = vdwg.mxu0
    %1639 = vmatprep.subr.mxu0 %v940
    %1640 = vmatpush1.msra.mxu0 %v939
    %1641 = vmatprep.subr.mxu0 %v944
    %1642 = vmatpush1.msra.mxu0 %v943
    %1643 = vmatprep.subr.mxu0 %v948
    %1644 = vmatpush1.msra.mxu0 %v947
    %1645 = vmatprep.subr.mxu0 %v952
    %1646 = vmatpush1.msra.mxu0 %v951
    %1647 = vmatprep.subr.mxu0 %v956
    %1648 = vmatpush1.msra.mxu0 %v955
    %1649 = vmatprep.subr.mxu0 %v960
    %1650 = vmatpush1.msra.mxu0 %v959
    %1651 = vmatprep.subr.mxu0 %v964
    %1652 = vmatpush1.msra.mxu0 %v963
    %1653 = vmatprep.subr.mxu0 %v968
    %1654 = vmatpush1.msra.mxu0 %v967
    %1655 = vmatprep.subr.mxu0 %v972
    %1656 = vmatpush1.msra.mxu0 %v971
    %1657 = vmatprep.subr.mxu0 %v976
    %1658 = vmatpush1.msra.mxu0 %v975
    %1659 = vmatprep.subr.mxu0 %v980
    %1660 = vmatpush1.msra.mxu0 %v979
    %1661 = vmatprep.subr.mxu0 %v984
    %1662 = vmatpush1.msra.mxu0 %v983
    %1663 = vmatprep.subr.mxu0 %v988
    %1664 = vmatpush1.msra.mxu0 %v987
    %1665 = vmatprep.subr.mxu0 %v992
    %1666 = vmatpush1.msra.mxu0 %v991
    %1667 = vmatprep.subr.mxu0 %v996
    %1668 = vmatpush1.msra.mxu0 %v995
    %1669 = vmatprep.subr.mxu0 %v1000
    %1670 = vmatpush1.msra.mxu0 %v999
    %1671 = vmatprep.subr.mxu0 %v1004
    %1672 = vmatpush1.msra.mxu0 %v1003
    %1673 = vmatprep.subr.mxu0 %v1008
    %1674 = vmatpush1.msra.mxu0 %v1007
    %1675 = vmatprep.subr.mxu0 %v1012
    %1676 = vmatpush1.msra.mxu0 %v1011
    %1677 = vmatprep.subr.mxu0 %v1016
    %1678 = vmatpush1.msra.mxu0 %v1015
    %1679 = vmatprep.subr.mxu0 %v1020
    %1680 = vmatpush1.msra.mxu0 %v1019
    %1681 = vmatprep.subr.mxu0 %v1024
    %1682 = vmatpush1.msra.mxu0 %v1023
    %1683 = vmatprep.subr.mxu0 %v1028
    %1684 = vmatpush1.msra.mxu0 %v1027
    %1685 = vmatprep.subr.mxu0 %v1032
    %1686 = vmatpush1.msra.mxu0 %v1031
    %1687 = vmatprep.subr.mxu0 %v1036
    %1688 = vmatpush1.msra.mxu0 %v1035
    %1689 = vmatprep.subr.mxu0 %v1040
    %1690 = vmatpush1.msra.mxu0 %v1039
    %1691 = vmatprep.subr.mxu0 %v1044
    %1692 = vmatpush1.msra.mxu0 %v1043
    %1693 = vmatprep.subr.mxu0 %v1048
    %1694 = vmatpush1.msra.mxu0 %v1047
    %1695 = vmatprep.subr.mxu0 %v1052
    %1696 = vmatpush1.msra.mxu0 %v1051
    %1697 = vmatprep.subr.mxu0 %v1056
    %1698 = vmatpush1.msra.mxu0 %v1055
    %1699 = vmatprep.subr.mxu0 %v1060
    %1700 = vmatpush1.msra.mxu0 %v1059
    %1701 = vmatprep.subr.mxu0 %v1064
    %1702 = vmatpush1.msra.mxu0 %v1063
    %1703 = vmatprep.mubr.f32.mxu0 %v608
    %1704 = vmatmul.mubr.f32.gmra.mrb[0].mxu0 %v606
    %v1705 = vpop.f32.mrb[0].mxu0
    %v1706 = vadd.f32 %v1635, %v1705
    %v1707 = vpop.f32.mrb[0].mxu0
    %v1708 = vadd.f32 %v1637, %v1707
    %1709 = vdwg.mxu0
    %1710 = vmatprep.subr.mxu0 %v1068
    %1711 = vmatpush1.msra.mxu0 %v1067
    %1712 = vmatprep.subr.mxu0 %v1072
    %1713 = vmatpush1.msra.mxu0 %v1071
    %1714 = vmatprep.subr.mxu0 %v1076
    %1715 = vmatpush1.msra.mxu0 %v1075
    %1716 = vmatprep.subr.mxu0 %v1080
    %1717 = vmatpush1.msra.mxu0 %v1079
    %1718 = vmatprep.subr.mxu0 %v1084
    %1719 = vmatpush1.msra.mxu0 %v1083
    %1720 = vmatprep.subr.mxu0 %v1088
    %1721 = vmatpush1.msra.mxu0 %v1087
    %1722 = vmatprep.subr.mxu0 %v1092
    %1723 = vmatpush1.msra.mxu0 %v1091
    %1724 = vmatprep.subr.mxu0 %v1096
    %1725 = vmatpush1.msra.mxu0 %v1095
    %1726 = vmatprep.subr.mxu0 %v1100
    %1727 = vmatpush1.msra.mxu0 %v1099
    %1728 = vmatprep.subr.mxu0 %v1104
    %1729 = vmatpush1.msra.mxu0 %v1103
    %1730 = vmatprep.subr.mxu0 %v1108
    %1731 = vmatpush1.msra.mxu0 %v1107
    %1732 = vmatprep.subr.mxu0 %v1112
    %1733 = vmatpush1.msra.mxu0 %v1111
    %1734 = vmatprep.subr.mxu0 %v1116
    %1735 = vmatpush1.msra.mxu0 %v1115
    %1736 = vmatprep.subr.mxu0 %v1120
    %1737 = vmatpush1.msra.mxu0 %v1119
    %1738 = vmatprep.subr.mxu0 %v1124
    %1739 = vmatpush1.msra.mxu0 %v1123
    %1740 = vmatprep.subr.mxu0 %v1128
    %1741 = vmatpush1.msra.mxu0 %v1127
    %1742 = vmatprep.subr.mxu0 %v1132
    %1743 = vmatpush1.msra.mxu0 %v1131
    %1744 = vmatprep.subr.mxu0 %v1136
    %1745 = vmatpush1.msra.mxu0 %v1135
    %1746 = vmatprep.subr.mxu0 %v1140
    %1747 = vmatpush1.msra.mxu0 %v1139
    %1748 = vmatprep.subr.mxu0 %v1144
    %1749 = vmatpush1.msra.mxu0 %v1143
    %1750 = vmatprep.subr.mxu0 %v1148
    %1751 = vmatpush1.msra.mxu0 %v1147
    %1752 = vmatprep.subr.mxu0 %v1152
    %1753 = vmatpush1.msra.mxu0 %v1151
    %1754 = vmatprep.subr.mxu0 %v1156
    %1755 = vmatpush1.msra.mxu0 %v1155
    %1756 = vmatprep.subr.mxu0 %v1160
    %1757 = vmatpush1.msra.mxu0 %v1159
    %1758 = vmatprep.subr.mxu0 %v1164
    %1759 = vmatpush1.msra.mxu0 %v1163
    %1760 = vmatprep.subr.mxu0 %v1168
    %1761 = vmatpush1.msra.mxu0 %v1167
    %1762 = vmatprep.subr.mxu0 %v1172
    %1763 = vmatpush1.msra.mxu0 %v1171
    %1764 = vmatprep.subr.mxu0 %v1176
    %1765 = vmatpush1.msra.mxu0 %v1175
    %1766 = vmatprep.subr.mxu0 %v1180
    %1767 = vmatpush1.msra.mxu0 %v1179
    %1768 = vmatprep.subr.mxu0 %v1184
    %1769 = vmatpush1.msra.mxu0 %v1183
    %1770 = vmatprep.subr.mxu0 %v1188
    %1771 = vmatpush1.msra.mxu0 %v1187
    %1772 = vmatprep.subr.mxu0 %v1192
    %1773 = vmatpush1.msra.mxu0 %v1191
    %1774 = vmatprep.mubr.f32.mxu0 %v679
    %1775 = vmatmul.mubr.f32.gmra.mrb[0].mxu0 %v677
    %v1776 = vpop.f32.mrb[0].mxu0
    %v1777 = vadd.f32 %v1706, %v1776
    %v1778 = vpop.f32.mrb[0].mxu0
    %v1779 = vadd.f32 %v1708, %v1778
    %1780 = vdwg.mxu0
    %v1781 = vld [vmem:[#allocation10] sm:$0xff]
    %v1782 = vld [vmem:[#allocation10 + $0x8] sm:$0xff]
    %v1783 = vld [vmem:[#allocation10 + $0x10] sm:$0xff]
    %v1784 = vld [vmem:[#allocation10 + $0x18] sm:$0xff]
    %v1785 = vld [vmem:[#allocation10 + $0x20] sm:$0xff]
    %v1786 = vld [vmem:[#allocation10 + $0x28] sm:$0xff]
    %v1787 = vld [vmem:[#allocation10 + $0x30] sm:$0xff]
    %v1788 = vld [vmem:[#allocation10 + $0x38] sm:$0xff]
    %v1789 = vld [vmem:[#allocation10 + $0x40] sm:$0xff]
    %v1790 = vld [vmem:[#allocation10 + $0x48] sm:$0xff]
    %v1791 = vld [vmem:[#allocation10 + $0x50] sm:$0xff]
    %v1792 = vld [vmem:[#allocation10 + $0x58] sm:$0xff]
    %v1793 = vld [vmem:[#allocation10 + $0x60] sm:$0xff]
    %v1794 = vld [vmem:[#allocation10 + $0x68] sm:$0xff]
    %v1795 = vld [vmem:[#allocation10 + $0x70] sm:$0xff]
    %v1796 = vld [vmem:[#allocation10 + $0x78] sm:$0xff]
    %v1797 = vld [vmem:[#allocation10 + $0x80] sm:$0xff]
    %v1798 = vld [vmem:[#allocation10 + $0x88] sm:$0xff]
    %v1799 = vld [vmem:[#allocation10 + $0x90] sm:$0xff]
    %v1800 = vld [vmem:[#allocation10 + $0x98] sm:$0xff]
    %v1801 = vld [vmem:[#allocation10 + $0xa0] sm:$0xff]
    %v1802 = vld [vmem:[#allocation10 + $0xa8] sm:$0xff]
    %v1803 = vld [vmem:[#allocation10 + $0xb0] sm:$0xff]
    %v1804 = vld [vmem:[#allocation10 + $0xb8] sm:$0xff]
    %v1805 = vld [vmem:[#allocation10 + $0xc0] sm:$0xff]
    %v1806 = vld [vmem:[#allocation10 + $0xc8] sm:$0xff]
    %v1807 = vld [vmem:[#allocation10 + $0xd0] sm:$0xff]
    %v1808 = vld [vmem:[#allocation10 + $0xd8] sm:$0xff]
    %v1809 = vld [vmem:[#allocation10 + $0xe0] sm:$0xff]
    %v1810 = vld [vmem:[#allocation10 + $0xe8] sm:$0xff]
    %v1811 = vld [vmem:[#allocation10 + $0xf0] sm:$0xff]
    %v1812 = vld [vmem:[#allocation10 + $0xf8] sm:$0xff]
    %v1813 = vld [vmem:[#allocation10 + $0x100] sm:$0xff]
    %v1814 = vld [vmem:[#allocation10 + $0x108] sm:$0xff]
    %v1815 = vld [vmem:[#allocation10 + $0x110] sm:$0xff]
    %v1816 = vld [vmem:[#allocation10 + $0x118] sm:$0xff]
    %v1817 = vld [vmem:[#allocation10 + $0x120] sm:$0xff]
    %v1818 = vld [vmem:[#allocation10 + $0x128] sm:$0xff]
    %v1819 = vld [vmem:[#allocation10 + $0x130] sm:$0xff]
    %v1820 = vld [vmem:[#allocation10 + $0x138] sm:$0xff]
    %v1821 = vld [vmem:[#allocation10 + $0x140] sm:$0xff]
    %v1822 = vld [vmem:[#allocation10 + $0x148] sm:$0xff]
    %v1823 = vld [vmem:[#allocation10 + $0x150] sm:$0xff]
    %v1824 = vld [vmem:[#allocation10 + $0x158] sm:$0xff]
    %v1825 = vld [vmem:[#allocation10 + $0x160] sm:$0xff]
    %v1826 = vld [vmem:[#allocation10 + $0x168] sm:$0xff]
    %v1827 = vld [vmem:[#allocation10 + $0x170] sm:$0xff]
    %v1828 = vld [vmem:[#allocation10 + $0x178] sm:$0xff]
    %v1829 = vld [vmem:[#allocation10 + $0x180] sm:$0xff]
    %v1830 = vld [vmem:[#allocation10 + $0x188] sm:$0xff]
    %v1831 = vld [vmem:[#allocation10 + $0x190] sm:$0xff]
    %v1832 = vld [vmem:[#allocation10 + $0x198] sm:$0xff]
    %v1833 = vld [vmem:[#allocation10 + $0x1a0] sm:$0xff]
    %v1834 = vld [vmem:[#allocation10 + $0x1a8] sm:$0xff]
    %v1835 = vld [vmem:[#allocation10 + $0x1b0] sm:$0xff]
    %v1836 = vld [vmem:[#allocation10 + $0x1b8] sm:$0xff]
    %v1837 = vld [vmem:[#allocation10 + $0x1c0] sm:$0xff]
    %v1838 = vld [vmem:[#allocation10 + $0x1c8] sm:$0xff]
    %v1839 = vld [vmem:[#allocation10 + $0x1d0] sm:$0xff]
    %v1840 = vld [vmem:[#allocation10 + $0x1d8] sm:$0xff]
    %v1841 = vld [vmem:[#allocation10 + $0x1e0] sm:$0xff]
    %v1842 = vld [vmem:[#allocation10 + $0x1e8] sm:$0xff]
    %v1843 = vld [vmem:[#allocation10 + $0x1f0] sm:$0xff]
    %v1844 = vld [vmem:[#allocation10 + $0x1f8] sm:$0xff]
    %v1845 = vld [vmem:[#allocation10 + $0x200] sm:$0xff]
    %v1846 = vld [vmem:[#allocation10 + $0x208] sm:$0xff]
    %v1847 = vld [vmem:[#allocation10 + $0x210] sm:$0xff]
    %v1848 = vld [vmem:[#allocation10 + $0x218] sm:$0xff]
    %v1849 = vld [vmem:[#allocation10 + $0x220] sm:$0xff]
    %v1850 = vld [vmem:[#allocation10 + $0x228] sm:$0xff]
    %v1851 = vld [vmem:[#allocation10 + $0x230] sm:$0xff]
    %v1852 = vld [vmem:[#allocation10 + $0x238] sm:$0xff]
    %v1853 = vld [vmem:[#allocation10 + $0x240] sm:$0xff]
    %v1854 = vld [vmem:[#allocation10 + $0x248] sm:$0xff]
    %v1855 = vld [vmem:[#allocation10 + $0x250] sm:$0xff]
    %v1856 = vld [vmem:[#allocation10 + $0x258] sm:$0xff]
    %v1857 = vld [vmem:[#allocation10 + $0x260] sm:$0xff]
    %v1858 = vld [vmem:[#allocation10 + $0x268] sm:$0xff]
    %v1859 = vld [vmem:[#allocation10 + $0x270] sm:$0xff]
    %v1860 = vld [vmem:[#allocation10 + $0x278] sm:$0xff]
    %v1861 = vld [vmem:[#allocation10 + $0x280] sm:$0xff]
    %v1862 = vld [vmem:[#allocation10 + $0x288] sm:$0xff]
    %v1863 = vld [vmem:[#allocation10 + $0x290] sm:$0xff]
    %v1864 = vld [vmem:[#allocation10 + $0x298] sm:$0xff]
    %v1865 = vld [vmem:[#allocation10 + $0x2a0] sm:$0xff]
    %v1866 = vld [vmem:[#allocation10 + $0x2a8] sm:$0xff]
    %v1867 = vld [vmem:[#allocation10 + $0x2b0] sm:$0xff]
    %v1868 = vld [vmem:[#allocation10 + $0x2b8] sm:$0xff]
    %v1869 = vld [vmem:[#allocation10 + $0x2c0] sm:$0xff]
    %v1870 = vld [vmem:[#allocation10 + $0x2c8] sm:$0xff]
    %v1871 = vld [vmem:[#allocation10 + $0x2d0] sm:$0xff]
    %v1872 = vld [vmem:[#allocation10 + $0x2d8] sm:$0xff]
    %v1873 = vld [vmem:[#allocation10 + $0x2e0] sm:$0xff]
    %v1874 = vld [vmem:[#allocation10 + $0x2e8] sm:$0xff]
    %v1875 = vld [vmem:[#allocation10 + $0x2f0] sm:$0xff]
    %v1876 = vld [vmem:[#allocation10 + $0x2f8] sm:$0xff]
    %v1877 = vld [vmem:[#allocation10 + $0x300] sm:$0xff]
    %v1878 = vld [vmem:[#allocation10 + $0x308] sm:$0xff]
    %v1879 = vld [vmem:[#allocation10 + $0x310] sm:$0xff]
    %v1880 = vld [vmem:[#allocation10 + $0x318] sm:$0xff]
    %v1881 = vld [vmem:[#allocation10 + $0x320] sm:$0xff]
    %v1882 = vld [vmem:[#allocation10 + $0x328] sm:$0xff]
    %v1883 = vld [vmem:[#allocation10 + $0x330] sm:$0xff]
    %v1884 = vld [vmem:[#allocation10 + $0x338] sm:$0xff]
    %v1885 = vld [vmem:[#allocation10 + $0x340] sm:$0xff]
    %v1886 = vld [vmem:[#allocation10 + $0x348] sm:$0xff]
    %v1887 = vld [vmem:[#allocation10 + $0x350] sm:$0xff]
    %v1888 = vld [vmem:[#allocation10 + $0x358] sm:$0xff]
    %v1889 = vld [vmem:[#allocation10 + $0x360] sm:$0xff]
    %v1890 = vld [vmem:[#allocation10 + $0x368] sm:$0xff]
    %v1891 = vld [vmem:[#allocation10 + $0x370] sm:$0xff]
    %v1892 = vld [vmem:[#allocation10 + $0x378] sm:$0xff]
    %v1893 = vld [vmem:[#allocation10 + $0x380] sm:$0xff]
    %v1894 = vld [vmem:[#allocation10 + $0x388] sm:$0xff]
    %v1895 = vld [vmem:[#allocation10 + $0x390] sm:$0xff]
    %v1896 = vld [vmem:[#allocation10 + $0x398] sm:$0xff]
    %v1897 = vld [vmem:[#allocation10 + $0x3a0] sm:$0xff]
    %v1898 = vld [vmem:[#allocation10 + $0x3a8] sm:$0xff]
    %v1899 = vld [vmem:[#allocation10 + $0x3b0] sm:$0xff]
    %v1900 = vld [vmem:[#allocation10 + $0x3b8] sm:$0xff]
    %v1901 = vld [vmem:[#allocation10 + $0x3c0] sm:$0xff]
    %v1902 = vld [vmem:[#allocation10 + $0x3c8] sm:$0xff]
    %v1903 = vld [vmem:[#allocation10 + $0x3d0] sm:$0xff]
    %v1904 = vld [vmem:[#allocation10 + $0x3d8] sm:$0xff]
    %v1905 = vld [vmem:[#allocation10 + $0x3e0] sm:$0xff]
    %v1906 = vld [vmem:[#allocation10 + $0x3e8] sm:$0xff]
    %v1907 = vld [vmem:[#allocation10 + $0x3f0] sm:$0xff]
    %v1908 = vld [vmem:[#allocation10 + $0x3f8] sm:$0xff]
    %v1909 = vld [vmem:[#allocation10 + $0x400] sm:$0x1]
    %v1910 = vld [vmem:[#allocation10 + $0x408] sm:$0x1]
    %v1911 = vlaneseq
    %v1912 = vshrl.u32 %v1911, 7
    %v1913 = vsub.s32 0, %v1912
    %v1914 = vrot.slane %v1909, %v1913
    %v1915 = vlaneseq
    %v1916 = vshrl.u32 %v1915, 7
    %v1917 = vsub.s32 0, %v1916
    %v1918 = vrot.slane %v1910, %v1917
    %1919 = vmatprep.subr.mxu0 %v1782
    %1920 = vmatpush1.msra.mxu0 %v1781
    %1921 = vmatprep.subr.mxu0 %v1784
    %1922 = vmatpush1.msra.mxu0 %v1783
    %1923 = vmatprep.subr.mxu0 %v1786
    %1924 = vmatpush1.msra.mxu0 %v1785
    %1925 = vmatprep.subr.mxu0 %v1788
    %1926 = vmatpush1.msra.mxu0 %v1787
    %1927 = vmatprep.subr.mxu0 %v1790
    %1928 = vmatpush1.msra.mxu0 %v1789
    %1929 = vmatprep.subr.mxu0 %v1792
    %1930 = vmatpush1.msra.mxu0 %v1791
    %1931 = vmatprep.subr.mxu0 %v1794
    %1932 = vmatpush1.msra.mxu0 %v1793
    %1933 = vmatprep.subr.mxu0 %v1796
    %1934 = vmatpush1.msra.mxu0 %v1795
    %1935 = vmatprep.subr.mxu0 %v1798
    %1936 = vmatpush1.msra.mxu0 %v1797
    %1937 = vmatprep.subr.mxu0 %v1800
    %1938 = vmatpush1.msra.mxu0 %v1799
    %1939 = vmatprep.subr.mxu0 %v1802
    %1940 = vmatpush1.msra.mxu0 %v1801
    %1941 = vmatprep.subr.mxu0 %v1804
    %1942 = vmatpush1.msra.mxu0 %v1803
    %1943 = vmatprep.subr.mxu0 %v1806
    %1944 = vmatpush1.msra.mxu0 %v1805
    %1945 = vmatprep.subr.mxu0 %v1808
    %1946 = vmatpush1.msra.mxu0 %v1807
    %1947 = vmatprep.subr.mxu0 %v1810
    %1948 = vmatpush1.msra.mxu0 %v1809
    %1949 = vmatprep.subr.mxu0 %v1812
    %1950 = vmatpush1.msra.mxu0 %v1811
    %1951 = vmatprep.subr.mxu0 %v1814
    %1952 = vmatpush1.msra.mxu0 %v1813
    %1953 = vmatprep.subr.mxu0 %v1816
    %1954 = vmatpush1.msra.mxu0 %v1815
    %1955 = vmatprep.subr.mxu0 %v1818
    %1956 = vmatpush1.msra.mxu0 %v1817
    %1957 = vmatprep.subr.mxu0 %v1820
    %1958 = vmatpush1.msra.mxu0 %v1819
    %1959 = vmatprep.subr.mxu0 %v1822
    %1960 = vmatpush1.msra.mxu0 %v1821
    %1961 = vmatprep.subr.mxu0 %v1824
    %1962 = vmatpush1.msra.mxu0 %v1823
    %1963 = vmatprep.subr.mxu0 %v1826
    %1964 = vmatpush1.msra.mxu0 %v1825
    %1965 = vmatprep.subr.mxu0 %v1828
    %1966 = vmatpush1.msra.mxu0 %v1827
    %1967 = vmatprep.subr.mxu0 %v1830
    %1968 = vmatpush1.msra.mxu0 %v1829
    %1969 = vmatprep.subr.mxu0 %v1832
    %1970 = vmatpush1.msra.mxu0 %v1831
    %1971 = vmatprep.subr.mxu0 %v1834
    %1972 = vmatpush1.msra.mxu0 %v1833
    %1973 = vmatprep.subr.mxu0 %v1836
    %1974 = vmatpush1.msra.mxu0 %v1835
    %1975 = vmatprep.subr.mxu0 %v1838
    %1976 = vmatpush1.msra.mxu0 %v1837
    %1977 = vmatprep.subr.mxu0 %v1840
    %1978 = vmatpush1.msra.mxu0 %v1839
    %1979 = vmatprep.subr.mxu0 %v1842
    %1980 = vmatpush1.msra.mxu0 %v1841
    %1981 = vmatprep.subr.mxu0 %v1844
    %1982 = vmatpush1.msra.mxu0 %v1843
    %1983 = vmatprep.mubr.f32.mxu0 %v1495
    %1984 = vmatmul.mubr.f32.gmra.mrb[0].mxu0 %v1493
    %v1985 = vpop.f32.mrb[0].mxu0
    %v1986 = vadd.f32 %v1914, %v1985
    %v1987 = vpop.f32.mrb[0].mxu0
    %v1988 = vadd.f32 %v1918, %v1987
    %1989 = vdwg.mxu0
    %1990 = vmatprep.subr.mxu0 %v1846
    %1991 = vmatpush1.msra.mxu0 %v1845
    %1992 = vmatprep.subr.mxu0 %v1848
    %1993 = vmatpush1.msra.mxu0 %v1847
    %1994 = vmatprep.subr.mxu0 %v1850
    %1995 = vmatpush1.msra.mxu0 %v1849
    %1996 = vmatprep.subr.mxu0 %v1852
    %1997 = vmatpush1.msra.mxu0 %v1851
    %1998 = vmatprep.subr.mxu0 %v1854
    %1999 = vmatpush1.msra.mxu0 %v1853
    %2000 = vmatprep.subr.mxu0 %v1856
    %2001 = vmatpush1.msra.mxu0 %v1855
    %2002 = vmatprep.subr.mxu0 %v1858
    %2003 = vmatpush1.msra.mxu0 %v1857
    %2004 = vmatprep.subr.mxu0 %v1860
    %2005 = vmatpush1.msra.mxu0 %v1859
    %2006 = vmatprep.subr.mxu0 %v1862
    %2007 = vmatpush1.msra.mxu0 %v1861
    %2008 = vmatprep.subr.mxu0 %v1864
    %2009 = vmatpush1.msra.mxu0 %v1863
    %2010 = vmatprep.subr.mxu0 %v1866
    %2011 = vmatpush1.msra.mxu0 %v1865
    %2012 = vmatprep.subr.mxu0 %v1868
    %2013 = vmatpush1.msra.mxu0 %v1867
    %2014 = vmatprep.subr.mxu0 %v1870
    %2015 = vmatpush1.msra.mxu0 %v1869
    %2016 = vmatprep.subr.mxu0 %v1872
    %2017 = vmatpush1.msra.mxu0 %v1871
    %2018 = vmatprep.subr.mxu0 %v1874
    %2019 = vmatpush1.msra.mxu0 %v1873
    %2020 = vmatprep.subr.mxu0 %v1876
    %2021 = vmatpush1.msra.mxu0 %v1875
    %2022 = vmatprep.subr.mxu0 %v1878
    %2023 = vmatpush1.msra.mxu0 %v1877
    %2024 = vmatprep.subr.mxu0 %v1880
    %2025 = vmatpush1.msra.mxu0 %v1879
    %2026 = vmatprep.subr.mxu0 %v1882
    %2027 = vmatpush1.msra.mxu0 %v1881
    %2028 = vmatprep.subr.mxu0 %v1884
    %2029 = vmatpush1.msra.mxu0 %v1883
    %2030 = vmatprep.subr.mxu0 %v1886
    %2031 = vmatpush1.msra.mxu0 %v1885
    %2032 = vmatprep.subr.mxu0 %v1888
    %2033 = vmatpush1.msra.mxu0 %v1887
    %2034 = vmatprep.subr.mxu0 %v1890
    %2035 = vmatpush1.msra.mxu0 %v1889
    %2036 = vmatprep.subr.mxu0 %v1892
    %2037 = vmatpush1.msra.mxu0 %v1891
    %2038 = vmatprep.subr.mxu0 %v1894
    %2039 = vmatpush1.msra.mxu0 %v1893
    %2040 = vmatprep.subr.mxu0 %v1896
    %2041 = vmatpush1.msra.mxu0 %v1895
    %2042 = vmatprep.subr.mxu0 %v1898
    %2043 = vmatpush1.msra.mxu0 %v1897
    %2044 = vmatprep.subr.mxu0 %v1900
    %2045 = vmatpush1.msra.mxu0 %v1899
    %2046 = vmatprep.subr.mxu0 %v1902
    %2047 = vmatpush1.msra.mxu0 %v1901
    %2048 = vmatprep.subr.mxu0 %v1904
    %2049 = vmatpush1.msra.mxu0 %v1903
    %2050 = vmatprep.subr.mxu0 %v1906
    %2051 = vmatpush1.msra.mxu0 %v1905
    %2052 = vmatprep.subr.mxu0 %v1908
    %2053 = vmatpush1.msra.mxu0 %v1907
    %2054 = vmatprep.mubr.f32.mxu0 %v1779
    %2055 = vmatmul.mubr.f32.gmra.mrb[0].mxu0 %v1777
    %v2056 = vpop.f32.mrb[0].mxu0
    %v2057 = vadd.f32 %v1986, %v2056
    %v2058 = vpop.f32.mrb[0].mxu0
    %v2059 = vadd.f32 %v1988, %v2058
    %2060 = vdwg.mxu0
    %v2061 = vadd.f32 %v90, %v91
    %v2062 = vadd.f32 %v92, %v93
    %v2063 = vadd.f32 %v94, %v95
    %v2064 = vadd.f32 %v96, %v97
    %v2065 = vadd.f32 %v2061, %v2062
    %v2066 = vadd.f32 %v2063, %v2064
    %v2067 = vadd.f32 %v2065, %v2066
    %v2069 = vcombine.high %v2061, %v2061
    %v2072 = vcombine.high %v2062, %v2062
    %v2075 = vcombine.high %v2063, %v2063
    %v2078 = vcombine.high %v2064, %v2064
    %v2080 = vmul.f32 %v2061, 0.5
    %v2081 = vmul.f32 %v2069, 0.5
    %v2082 = vmul.f32 %v2062, 0.5
    %v2083 = vmul.f32 %v2072, 0.5
    %v2084 = vmul.f32 %v2063, 0.5
    %v2085 = vmul.f32 %v2075, 0.5
    %v2086 = vmul.f32 %v2064, 0.5
    %v2087 = vmul.f32 %v2078, 0.5
    %v2089 = vcombine.high %v2065, %v2065
    %v2092 = vcombine.high %v2066, %v2066
    %v2094 = vmul.f32 %v2065, 0.25
    %v2095 = vmul.f32 %v2089, 0.25
    %v2096 = vmul.f32 %v2066, 0.25
    %v2097 = vmul.f32 %v2092, 0.25
    %v2098 = vmul.f32 %v2067, 0.125
    %v2099 = vadd.f32 %v464, %v2080
    %v2100 = vadd.f32 %v466, %v2081
    %v2101 = vadd.f32 %v535, %v2082
    %v2102 = vadd.f32 %v537, %v2083
    %v2103 = vadd.f32 %v606, %v2084
    %v2104 = vadd.f32 %v608, %v2085
    %v2105 = vadd.f32 %v677, %v2086
    %v2106 = vadd.f32 %v679, %v2087
    %v2115 = vcombine.low %v2099, %v2100
    %v2116 = vcombine.low %v2101, %v2102
    %v2117 = vcombine.low %v2103, %v2104
    %v2118 = vcombine.low %v2105, %v2106
    %2123 = vst [vmem:[#allocation11] sm:$0xff] %v2115
    %2124 = vst [vmem:[#allocation11 + $0x8] sm:$0xff] %v2116
    %2125 = vst [vmem:[#allocation11 + $0x10] sm:$0xff] %v2117
    %2126 = vst [vmem:[#allocation11 + $0x18] sm:$0xff] %v2118
    %v2127 = vadd.f32 %v1493, %v2094
    %v2128 = vadd.f32 %v1495, %v2095
    %v2129 = vadd.f32 %v1777, %v2096
    %v2130 = vadd.f32 %v1779, %v2097
    %v2135 = vcombine.low %v2127, %v2128
    %v2136 = vcombine.low %v2129, %v2130
    %2139 = vst [vmem:[#allocation12] sm:$0xff] %v2135
    %2140 = vst [vmem:[#allocation12 + $0x8] sm:$0xff] %v2136
    %v2142 = vcombine.high %v2098, %v2098
    %v2144 = vadd.f32 %v2057, %v2098
    %v2145 = vadd.f32 %v2059, %v2142
    %v2148 = vcombine.low %v2144, %v2145
    %2150 = vst [vmem:[#allocation14] sm:$0xff] %v2148
    // Predicated region
    $region42: #{tpu_custom_call.1} parent=1 // pred_check
      _
    $region43: #{tpu_custom_call.1} parent=1 // pred_check_branch
      %2152 = sbr.rel (0) target = $region45
    $region44: #{tpu_custom_call.1} parent=1 // pred_region
      %s2154 = ssub.s32 512, 512
      %2155 = vsyncadd [#allocation4], %s2154
      %s2157 = sshll.u32 [#allocation11], 4
      %s2158 = int_to_ptr.vmem [resolvable:$true] %s2157
      %2160 = dma.vmem_to_hbm [thread:$0]  %s2158, 512, %s5, [#allocation4]
    $region45: #{tpu_custom_call.1} parent=1 // pred_fallthru
      _
    // Predicated region
    $region46: #{tpu_custom_call.1} parent=1 // pred_check
      _
    $region47: #{tpu_custom_call.1} parent=1 // pred_check_branch
      %2162 = sbr.rel (0) target = $region49
    $region48: #{tpu_custom_call.1} parent=1 // pred_region
      %s2164 = ssub.s32 256, 256
      %2165 = vsyncadd [#allocation13], %s2164
      %s2167 = sshll.u32 [#allocation12], 4
      %s2168 = int_to_ptr.vmem [resolvable:$true] %s2167
      %2170 = dma.vmem_to_hbm [thread:$0]  %s2168, 256, %s6, [#allocation13]
    $region49: #{tpu_custom_call.1} parent=1 // pred_fallthru
      _
    // Predicated region
    $region50: #{tpu_custom_call.1} parent=1 // pred_check
      _
    $region51: #{tpu_custom_call.1} parent=1 // pred_check_branch
      %2172 = sbr.rel (0) target = $region53
    $region52: #{tpu_custom_call.1} parent=1 // pred_region
      %s2174 = ssub.s32 128, 128
      %2175 = vsyncadd [#allocation13], %s2174
      %s2177 = sshll.u32 [#allocation14], 4
      %s2178 = int_to_ptr.vmem [resolvable:$true] %s2177
      %2180 = dma.vmem_to_hbm [thread:$0]  %s2178, 128, %s7, [#allocation13]
    $region53: #{tpu_custom_call.1} parent=1 // pred_fallthru
      _
    // Predicated region
    $region54: #{tpu_custom_call.1} parent=1 // pred_check
      _
    $region55: #{tpu_custom_call.1} parent=1 // pred_check_branch
      %2182 = sbr.rel (0) target = $region57
    $region56: #{tpu_custom_call.1} parent=1 // pred_region
      %2183 = dma.done [#allocation4], 512
    $region57: #{tpu_custom_call.1} parent=1 // pred_fallthru
      _
    // Predicated region
    $region58: #{tpu_custom_call.1} parent=1 // pred_check
      _
    $region59: #{tpu_custom_call.1} parent=1 // pred_check_branch
      %2185 = sbr.rel (0) target = $region61
    $region60: #{tpu_custom_call.1} parent=1 // pred_region
      %2186 = dma.done [#allocation13], 256
    $region61: #{tpu_custom_call.1} parent=1 // pred_fallthru
      _
    // Predicated region
    $region62: #{tpu_custom_call.1} parent=1 // pred_check
      _
    $region63: #{tpu_custom_call.1} parent=1 // pred_check_branch
      %2188 = sbr.rel (0) target = $region65
    $region64: #{tpu_custom_call.1} parent=1 // pred_region
      %2189 = dma.done [#allocation13], 128
    $region65: #{tpu_custom_call.1} parent=1 // pred_fallthru
      _
    %2190 = vsyncpa [#allocation3], 1
    %2191 = vsyncpa [#allocation6], 1
    %2192 = vsyncpa [#allocation9], 1
    %2193 = vsyncpa [#allocation4], 1
    %2194 = vsyncpa [#allocation13], 1

</llo_original>
